<compile_context>
chip_gen: v7x
topology: tpu7x:2x2x1
jax: 0.10.0
libtpu: 0.0.40
codegen_flags: <defaults>
</compile_context>

<pallas_src>
import functools

import jax
import jax.numpy as jnp
from jax.experimental import pallas as pl
from jax.experimental.pallas import tpu as pltpu

KSIZE = 7       # conv kernel size of the dilated conv
LANE = 128      # TPU lane width  (last dim)
SUBLANE = 8     # TPU sublane width (second-to-last dim)


def _round_up(x, m):
    return (x + m - 1) // m * m


# ---------------------------------------------------------------------------
# Pallas kernel
# ---------------------------------------------------------------------------
def _residual_unit_kernel(dilation, pad, t_tile, mxu_dtype,
                          x_hbm,                       # (B, Tp + 2*pad, Cp) in HBM
                          a1_ref, ib1_ref, w1_ref, b1_ref,
                          a2_ref, ib2_ref, w2_ref, b2_ref,
                          o_ref,                       # (t_tile, Cp) output block
                          xbuf, copy_sem):             # VMEM scratch + DMA sem
    b = pl.program_id(0)
    t = pl.program_id(1)
    win = t_tile + 2 * pad

    # Manual DMA of the halo'd window for this output tile.
    row0 = pl.multiple_of(t * t_tile, SUBLANE)
    cp = pltpu.make_async_copy(x_hbm.at[b, pl.ds(row0, win), :], xbuf, copy_sem)
    cp.start()
    cp.wait()

    xf = xbuf[...].astype(jnp.float32)                 # (win, Cp), f32

    # SnakeBeta #1:  x + inv_beta * sin(x * alpha)^2   (alpha/inv_beta hoisted)
    s1 = jnp.sin(xf * a1_ref[...])
    h1 = (xf + ib1_ref[...] * (s1 * s1)).astype(mxu_dtype)

    # Dilated K=7 conv as a single im2col matmul: (t_tile, 7*Cp) @ (7*Cp, Cp).
    taps = [h1[k * dilation: k * dilation + t_tile, :] for k in range(KSIZE)]
    slab = jnp.concatenate(taps, axis=-1)              # (t_tile, 7*Cp)
    y = jnp.dot(slab, w1_ref[...], preferred_element_type=jnp.float32)
    y = y + b1_ref[...]

    # SnakeBeta #2.
    s2 = jnp.sin(y * a2_ref[...])
    h2 = (y + ib2_ref[...] * (s2 * s2)).astype(mxu_dtype)

    # 1x1 conv.
    y2 = jnp.dot(h2, w2_ref[...], preferred_element_type=jnp.float32)
    y2 = y2 + b2_ref[...]

    # Residual add with the (full-precision) centre rows of the input window.
    o_ref[...] = (xf[pad: pad + t_tile, :] + y2).astype(o_ref.dtype)


# ---------------------------------------------------------------------------
# Wrapper: takes PyTorch-layout (B, C, T) input and torch-layout params.
# ---------------------------------------------------------------------------
def residual_unit_pallas(x_bct, params, dilation, *, t_tile=512,
                         compute_dtype=None):
    """ResidualUnit forward.  x_bct: (B, C, T).  params: dict (torch layout)."""
    B, C, T = x_bct.shape
    pad = (KSIZE - 1) * dilation // 2

    x = jnp.transpose(x_bct, (0, 2, 1))                # (B, T, C) channels-last
    cdt = jnp.dtype(compute_dtype) if compute_dtype is not None else x.dtype

    # Lane-dense channel padding; time tiling (+ conv halo) padding.
    Cp = _round_up(C, LANE)
    tT = _round_up(min(t_tile, _round_up(T, SUBLANE)), SUBLANE)
    nT = pl.cdiv(T, tT)
    Tp = nT * tT
    win = tT + 2 * pad

    # Zero pad: halo rows for the conv, tail rows to a tile multiple, channels
    # to a lane multiple.  Exact: snake(0) == 0 and padded weight rows/cols are 0.
    x = jnp.pad(x, ((0, 0), (pad, pad + (Tp - T)), (0, Cp - C)))

    # --- parameter prep (hoisted out of the kernel) ------------------------
    def vec(v):                                        # (C,) -> (1, Cp) f32
        return jnp.pad(v.astype(jnp.float32), (0, Cp - C)).reshape(1, Cp)

    a1 = vec(jnp.exp(params["alpha1"]))
    ib1 = vec(1.0 / (jnp.exp(params["beta1"]) + 1e-9))
    a2 = vec(jnp.exp(params["alpha2"]))
    ib2 = vec(1.0 / (jnp.exp(params["beta2"]) + 1e-9))
    b1 = vec(params["b1"])
    b2 = vec(params["b2"])

    # w1: torch (Cout, Cin, K) -> (K, Cin, Cout) -> pad -> im2col (K*Cp, Cp)
    w1 = jnp.transpose(params["w1"], (2, 1, 0))
    w1 = jnp.pad(w1, ((0, 0), (0, Cp - C), (0, Cp - C)))
    w1 = w1.reshape(KSIZE * Cp, Cp).astype(cdt)
    # w2: torch (Cout, Cin, 1) -> (Cin, Cout) -> pad
    w2 = jnp.pad(params["w2"][:, :, 0].T, ((0, Cp - C), (0, Cp - C))).astype(cdt)

    const2d = lambda b, t: (0, 0)
    kern = functools.partial(_residual_unit_kernel, dilation, pad, tT, cdt)

    out = pl.pallas_call(
        kern,
        out_shape=jax.ShapeDtypeStruct((B, Tp, Cp), x_bct.dtype),
        grid_spec=pltpu.PrefetchScalarGridSpec(
            num_scalar_prefetch=0,
            grid=(B, nT),
            in_specs=[
                pl.BlockSpec(memory_space=pl.ANY),         # x (padded, HBM)
                pl.BlockSpec((1, Cp), const2d),            # exp(alpha1)
                pl.BlockSpec((1, Cp), const2d),            # 1/(exp(beta1)+eps)
                pl.BlockSpec((KSIZE * Cp, Cp), const2d),   # w1 (im2col layout)
                pl.BlockSpec((1, Cp), const2d),            # bias1
                pl.BlockSpec((1, Cp), const2d),            # exp(alpha2)
                pl.BlockSpec((1, Cp), const2d),            # 1/(exp(beta2)+eps)
                pl.BlockSpec((Cp, Cp), const2d),           # w2
                pl.BlockSpec((1, Cp), const2d),            # bias2
            ],
            out_specs=pl.BlockSpec((None, tT, Cp), lambda b, t: (b, t, 0)),
            scratch_shapes=[
                pltpu.VMEM((win, Cp), x.dtype),            # halo'd input window
                pltpu.SemaphoreType.DMA,
            ],
        ),
        compiler_params=pltpu.CompilerParams(
            dimension_semantics=("parallel", "parallel"),
            vmem_limit_bytes=48 * 1024 * 1024,
        ),
    )(x, a1, ib1, w1, b1, a2, ib2, w2, b2)

    out = out[:, :T, :C]                               # drop time/channel padding
    return jnp.transpose(out, (0, 2, 1))               # back to (B, C, T)


# ---------------------------------------------------------------------------
# Deterministic parameter construction (mirrors the module's __init__)
# ---------------------------------------------------------------------------
def _weight_norm_weight(v, g):
    norm = jnp.sqrt(jnp.sum(v * v, axis=(1, 2), keepdims=True))
    return g * v / norm


def make_params(key, dim):
    k1, k2, k3, k4 = jax.random.split(key, 4)

    # SnakeBeta(dim, alpha_logscale=True): alpha = beta = zeros (log-scale)
    alpha1 = jnp.zeros((dim,), jnp.float32)
    beta1 = jnp.zeros((dim,), jnp.float32)
    alpha2 = jnp.zeros((dim,), jnp.float32)
    beta2 = jnp.zeros((dim,), jnp.float32)

    # WNConv1d(dim, dim, kernel_size=7)
    v1 = jax.random.normal(k1, (dim, dim, KSIZE), jnp.float32) * 0.1
    g1 = jnp.sqrt(jnp.sum(v1 * v1, axis=(1, 2), keepdims=True))
    w1 = _weight_norm_weight(v1, g1)                   # (Cout, Cin, 7)
    b1 = jax.random.uniform(k2, (dim,), jnp.float32, -0.1, 0.1)

    # WNConv1d(dim, dim, kernel_size=1)
    v2 = jax.random.normal(k3, (dim, dim, 1), jnp.float32) * 0.1
    g2 = jnp.sqrt(jnp.sum(v2 * v2, axis=(1, 2), keepdims=True))
    w2 = _weight_norm_weight(v2, g2)                   # (Cout, Cin, 1)
    b2 = jax.random.uniform(k4, (dim,), jnp.float32, -0.1, 0.1)

    return dict(alpha1=alpha1, beta1=beta1, w1=w1, b1=b1,
                alpha2=alpha2, beta2=beta2, w2=w2, b2=b2)


# ---------------------------------------------------------------------------
# Pure-JAX reference (NCT layout, as in PyTorch)
# ---------------------------------------------------------------------------
def reference_forward(x_bct, p, dilation):
    def snake(x, a, b):
        a = jnp.exp(a)[None, :, None]
        b = jnp.exp(b)[None, :, None]
        return x + 1.0 / (b + 1e-9) * jnp.sin(x * a) ** 2

    pad = (KSIZE - 1) * dilation // 2
    h = snake(x_bct, p["alpha1"], p["beta1"])
    h = jax.lax.conv_general_dilated(
        h, p["w1"], window_strides=(1,), padding=[(pad, pad)],
        rhs_dilation=(dilation,), dimension_numbers=("NCH", "OIH", "NCH"),
    ) + p["b1"][None, :, None]
    h = snake(h, p["alpha2"], p["beta2"])
    h = jax.lax.conv_general_dilated(
        h, p["w2"], window_strides=(1,), padding=[(0, 0)],
        dimension_numbers=("NCH", "OIH", "NCH"),
    ) + p["b2"][None, :, None]
    return x_bct + h


# ---------------------------------------------------------------------------
if __name__ == "__main__":
    B, DIM, T = 2, 16, 40                              # small test shapes

    key = jax.random.PRNGKey(0)
    kx, kp = jax.random.split(key)
    x_bct = jax.random.normal(kx, (B, DIM, T), jnp.float32)   # PyTorch NCT input
    params = make_params(kp, DIM)

    # t_tile=16 forces multi-tile execution (3 time tiles + tail padding) so the
    # halo / tiling path is exercised; production would use t_tile ~512-1024.
    for dilation in (1, 3):
        out_bct = residual_unit_pallas(x_bct, params, dilation, t_tile=16)
        out_bct = jax.block_until_ready(out_bct)
        ref_bct = jax.block_until_ready(reference_forward(x_bct, params, dilation))
        assert out_bct.shape == (B, DIM, T)
        err = float(jnp.max(jnp.abs(out_bct - ref_bct)))
        assert jnp.allclose(out_bct, ref_bct, atol=1e-4, rtol=1e-4), (dilation, err)

    print("KERNEL_OK")
</pallas_src>

<mosaic_0001>
module attributes {stable_mosaic.version = 11 : i64} {
  func.func @_residual_unit_kernel(%arg0: i32, %arg1: i32, %arg2: memref<2x54x128xf32, #tpu.memory_space<any>>, %arg3: memref<1x128xf32, #tpu.memory_space<vmem>>, %arg4: memref<1x128xf32, #tpu.memory_space<vmem>>, %arg5: memref<896x128xf32, #tpu.memory_space<vmem>>, %arg6: memref<1x128xf32, #tpu.memory_space<vmem>>, %arg7: memref<1x128xf32, #tpu.memory_space<vmem>>, %arg8: memref<1x128xf32, #tpu.memory_space<vmem>>, %arg9: memref<128x128xf32, #tpu.memory_space<vmem>>, %arg10: memref<1x128xf32, #tpu.memory_space<vmem>>, %arg11: memref<1x16x128xf32, #tpu.memory_space<vmem>>, %arg12: memref<22x128xf32, #tpu.memory_space<vmem>>, %arg13: memref<!tpu.dma_semaphore, #tpu.memory_space<semaphore_mem>>) attributes {dimension_semantics = [#tpu.dimension_semantics<parallel>, #tpu.dimension_semantics<parallel>], iteration_bounds = array<i64: 2, 3>, scalar_prefetch = 0 : i64, scratch_operands = 2 : i64, tpu.core_type = #tpu.core_type<tc>, window_params = [{}, {pipeline_mode = #tpu.pipeline_mode<synchronous>, transform_indices = @transform_1, window_bounds = array<i64: 1, 128>}, {pipeline_mode = #tpu.pipeline_mode<synchronous>, transform_indices = @transform_2, window_bounds = array<i64: 1, 128>}, {pipeline_mode = #tpu.pipeline_mode<synchronous>, transform_indices = @transform_3, window_bounds = array<i64: 896, 128>}, {pipeline_mode = #tpu.pipeline_mode<synchronous>, transform_indices = @transform_4, window_bounds = array<i64: 1, 128>}, {pipeline_mode = #tpu.pipeline_mode<synchronous>, transform_indices = @transform_5, window_bounds = array<i64: 1, 128>}, {pipeline_mode = #tpu.pipeline_mode<synchronous>, transform_indices = @transform_6, window_bounds = array<i64: 1, 128>}, {pipeline_mode = #tpu.pipeline_mode<synchronous>, transform_indices = @transform_7, window_bounds = array<i64: 128, 128>}, {pipeline_mode = #tpu.pipeline_mode<synchronous>, transform_indices = @transform_8, window_bounds = array<i64: 1, 128>}, {transform_indices = @transform_9, window_bounds = array<i64: 1, 16, 128>}]} {
    %c16_i32 = arith.constant 16 : i32
    %0 = arith.muli %arg1, %c16_i32 : i32
    %1 = tpu.assume_multiple %0, 8 : i32
    %c0_i32 = arith.constant 0 : i32
    %2 = tpu.memref_slice %arg2[%arg0, %1, %c0_i32] : memref<2x54x128xf32, #tpu.memory_space<any>> -> memref<1x22x128xf32, #tpu.memory_space<any>>
    %3 = tpu.memref_squeeze %2 : memref<1x22x128xf32, #tpu.memory_space<any>> -> memref<22x128xf32, #tpu.memory_space<any>>
    tpu.enqueue_dma source(%3 : memref<22x128xf32, #tpu.memory_space<any>>) target(%arg12 : memref<22x128xf32, #tpu.memory_space<vmem>>) target_semaphore(%arg13 : memref<!tpu.dma_semaphore, #tpu.memory_space<semaphore_mem>>)
    %c0_i32_0 = arith.constant 0 : i32
    %4 = tpu.memref_slice %arg2[%arg0, %1, %c0_i32_0] : memref<2x54x128xf32, #tpu.memory_space<any>> -> memref<1x22x128xf32, #tpu.memory_space<any>>
    %5 = tpu.memref_squeeze %4 : memref<1x22x128xf32, #tpu.memory_space<any>> -> memref<22x128xf32, #tpu.memory_space<any>>
    tpu.wait_dma2 semaphore(%arg13 : memref<!tpu.dma_semaphore, #tpu.memory_space<semaphore_mem>>) src(%5 : memref<22x128xf32, #tpu.memory_space<any>>) dst(%arg12 : memref<22x128xf32, #tpu.memory_space<vmem>>)
    %c0 = arith.constant 0 : index
    %c0_1 = arith.constant 0 : index
    %6 = vector.load %arg12[%c0, %c0_1] : memref<22x128xf32, #tpu.memory_space<vmem>>, vector<22x128xf32>
    %c0_2 = arith.constant 0 : index
    %c0_3 = arith.constant 0 : index
    %7 = vector.load %arg3[%c0_2, %c0_3] : memref<1x128xf32, #tpu.memory_space<vmem>>, vector<1x128xf32>
    %8 = vector.broadcast %7 : vector<1x128xf32> to vector<22x128xf32>
    %9 = arith.mulf %6, %8 : vector<22x128xf32>
    %10 = math.sin %9 : vector<22x128xf32>
    %c0_4 = arith.constant 0 : index
    %c0_5 = arith.constant 0 : index
    %11 = vector.load %arg4[%c0_4, %c0_5] : memref<1x128xf32, #tpu.memory_space<vmem>>, vector<1x128xf32>
    %12 = arith.mulf %10, %10 : vector<22x128xf32>
    %13 = vector.broadcast %11 : vector<1x128xf32> to vector<22x128xf32>
    %14 = arith.mulf %13, %12 : vector<22x128xf32>
    %15 = arith.addf %6, %14 : vector<22x128xf32>
    %16 = vector.extract_strided_slice %15 {offsets = [0, 0], sizes = [16, 128], strides = [1, 1]} : vector<22x128xf32> to vector<16x128xf32>
    %17 = vector.extract_strided_slice %15 {offsets = [1, 0], sizes = [16, 128], strides = [1, 1]} : vector<22x128xf32> to vector<16x128xf32>
    %18 = vector.extract_strided_slice %15 {offsets = [2, 0], sizes = [16, 128], strides = [1, 1]} : vector<22x128xf32> to vector<16x128xf32>
    %19 = vector.extract_strided_slice %15 {offsets = [3, 0], sizes = [16, 128], strides = [1, 1]} : vector<22x128xf32> to vector<16x128xf32>
    %20 = vector.extract_strided_slice %15 {offsets = [4, 0], sizes = [16, 128], strides = [1, 1]} : vector<22x128xf32> to vector<16x128xf32>
    %21 = vector.extract_strided_slice %15 {offsets = [5, 0], sizes = [16, 128], strides = [1, 1]} : vector<22x128xf32> to vector<16x128xf32>
    %22 = vector.extract_strided_slice %15 {offsets = [6, 0], sizes = [16, 128], strides = [1, 1]} : vector<22x128xf32> to vector<16x128xf32>
    %23 = tpu.concatenate %16, %17, %18, %19, %20, %21, %22 in 1 : vector<16x128xf32>, vector<16x128xf32>, vector<16x128xf32>, vector<16x128xf32>, vector<16x128xf32>, vector<16x128xf32>, vector<16x128xf32> -> vector<16x896xf32>
    %c0_6 = arith.constant 0 : index
    %c0_7 = arith.constant 0 : index
    %24 = vector.load %arg5[%c0_6, %c0_7] : memref<896x128xf32, #tpu.memory_space<vmem>>, vector<896x128xf32>
    %cst = arith.constant dense<0.000000e+00> : vector<16x128xf32>
    %25 = tpu.matmul %23, %24, %cst {dimension_numbers = #tpu.dot_dimension_numbers<[1], [0], [0], [1], [0, 0, 1, 1], [], []>} : vector<16x896xf32>, vector<896x128xf32>, vector<16x128xf32> -> vector<16x128xf32>
    %c0_8 = arith.constant 0 : index
    %c0_9 = arith.constant 0 : index
    %26 = vector.load %arg6[%c0_8, %c0_9] : memref<1x128xf32, #tpu.memory_space<vmem>>, vector<1x128xf32>
    %27 = vector.broadcast %26 : vector<1x128xf32> to vector<16x128xf32>
    %28 = arith.addf %25, %27 : vector<16x128xf32>
    %c0_10 = arith.constant 0 : index
    %c0_11 = arith.constant 0 : index
    %29 = vector.load %arg7[%c0_10, %c0_11] : memref<1x128xf32, #tpu.memory_space<vmem>>, vector<1x128xf32>
    %30 = vector.broadcast %29 : vector<1x128xf32> to vector<16x128xf32>
    %31 = arith.mulf %28, %30 : vector<16x128xf32>
    %32 = math.sin %31 : vector<16x128xf32>
    %c0_12 = arith.constant 0 : index
    %c0_13 = arith.constant 0 : index
    %33 = vector.load %arg8[%c0_12, %c0_13] : memref<1x128xf32, #tpu.memory_space<vmem>>, vector<1x128xf32>
    %34 = arith.mulf %32, %32 : vector<16x128xf32>
    %35 = vector.broadcast %33 : vector<1x128xf32> to vector<16x128xf32>
    %36 = arith.mulf %35, %34 : vector<16x128xf32>
    %37 = arith.addf %28, %36 : vector<16x128xf32>
    %c0_14 = arith.constant 0 : index
    %c0_15 = arith.constant 0 : index
    %38 = vector.load %arg9[%c0_14, %c0_15] : memref<128x128xf32, #tpu.memory_space<vmem>>, vector<128x128xf32>
    %cst_16 = arith.constant dense<0.000000e+00> : vector<16x128xf32>
    %39 = tpu.matmul %37, %38, %cst_16 {dimension_numbers = #tpu.dot_dimension_numbers<[1], [0], [0], [1], [0, 0, 1, 1], [], []>} : vector<16x128xf32>, vector<128x128xf32>, vector<16x128xf32> -> vector<16x128xf32>
    %c0_17 = arith.constant 0 : index
    %c0_18 = arith.constant 0 : index
    %40 = vector.load %arg10[%c0_17, %c0_18] : memref<1x128xf32, #tpu.memory_space<vmem>>, vector<1x128xf32>
    %41 = vector.broadcast %40 : vector<1x128xf32> to vector<16x128xf32>
    %42 = arith.addf %39, %41 : vector<16x128xf32>
    %43 = vector.extract_strided_slice %6 {offsets = [3, 0], sizes = [16, 128], strides = [1, 1]} : vector<22x128xf32> to vector<16x128xf32>
    %44 = arith.addf %43, %42 : vector<16x128xf32>
    %c0_19 = arith.constant 0 : index
    %c0_20 = arith.constant 0 : index
    %c0_21 = arith.constant 0 : index
    %45 = vector.load %arg11[%c0_19, %c0_20, %c0_21] : memref<1x16x128xf32, #tpu.memory_space<vmem>>, vector<1x16x128xf32>
    %46 = vector.shape_cast %45 : vector<1x16x128xf32> to vector<16x128xf32>
    %47 = vector.shape_cast %44 : vector<16x128xf32> to vector<1x16x128xf32>
    tpu.vector_store %arg11[%c0_19, %c0_20, %c0_21], %47 {strides = array<i32>} : memref<1x16x128xf32, #tpu.memory_space<vmem>>, vector<1x16x128xf32>,
    return
  }
  func.func @transform_1(%arg0: i32, %arg1: i32) -> (i32, i32) {
    %c0_i32 = arith.constant 0 : i32
    %c0_i32_0 = arith.constant 0 : i32
    %c0_i32_1 = arith.constant 0 : i32
    return %c0_i32, %c0_i32_0 : i32, i32
  }
  func.func @transform_2(%arg0: i32, %arg1: i32) -> (i32, i32) {
    %c0_i32 = arith.constant 0 : i32
    %c0_i32_0 = arith.constant 0 : i32
    %c0_i32_1 = arith.constant 0 : i32
    return %c0_i32, %c0_i32_0 : i32, i32
  }
  func.func @transform_3(%arg0: i32, %arg1: i32) -> (i32, i32) {
    %c0_i32 = arith.constant 0 : i32
    %c0_i32_0 = arith.constant 0 : i32
    %c0_i32_1 = arith.constant 0 : i32
    return %c0_i32, %c0_i32_0 : i32, i32
  }
  func.func @transform_4(%arg0: i32, %arg1: i32) -> (i32, i32) {
    %c0_i32 = arith.constant 0 : i32
    %c0_i32_0 = arith.constant 0 : i32
    %c0_i32_1 = arith.constant 0 : i32
    return %c0_i32, %c0_i32_0 : i32, i32
  }
  func.func @transform_5(%arg0: i32, %arg1: i32) -> (i32, i32) {
    %c0_i32 = arith.constant 0 : i32
    %c0_i32_0 = arith.constant 0 : i32
    %c0_i32_1 = arith.constant 0 : i32
    return %c0_i32, %c0_i32_0 : i32, i32
  }
  func.func @transform_6(%arg0: i32, %arg1: i32) -> (i32, i32) {
    %c0_i32 = arith.constant 0 : i32
    %c0_i32_0 = arith.constant 0 : i32
    %c0_i32_1 = arith.constant 0 : i32
    return %c0_i32, %c0_i32_0 : i32, i32
  }
  func.func @transform_7(%arg0: i32, %arg1: i32) -> (i32, i32) {
    %c0_i32 = arith.constant 0 : i32
    %c0_i32_0 = arith.constant 0 : i32
    %c0_i32_1 = arith.constant 0 : i32
    return %c0_i32, %c0_i32_0 : i32, i32
  }
  func.func @transform_8(%arg0: i32, %arg1: i32) -> (i32, i32) {
    %c0_i32 = arith.constant 0 : i32
    %c0_i32_0 = arith.constant 0 : i32
    %c0_i32_1 = arith.constant 0 : i32
    return %c0_i32, %c0_i32_0 : i32, i32
  }
  func.func @transform_9(%arg0: i32, %arg1: i32) -> (i32, i32, i32) {
    %c0_i32 = arith.constant 0 : i32
    %c0_i32_0 = arith.constant 0 : i32
    return %arg0, %arg1, %c0_i32 : i32, i32, i32
  }
}

</mosaic_0001>

<llo_original>
// kernel: tpu_custom_call.1
$region0: #{tpu_custom_call.1}
  #allocation0 [shape = 'u32[]', space=smem, size = 0x4, offset = 0x4, fixed_abs, tag = 'smem constant byte address 0x4 - core index']
  #allocation1 [shape = 'u32[144,128]{1,0:T(1,128)}', space=vmem, size = 0x12000, scoped, tag = 'internal scratch']
  #allocation2 [shape = 'f32[22,128]{1,0:T(8,128)}', space=vmem, size = 0x3000, scoped, tag = 'scratch operand']
  #allocation3 [shape = 's32[1]{0}', space=sflag, size = 0x4, scoped, tag = 'scratch operand']
  #allocation8 [shape = 's32[]', space=sflag, size = 0x4, offset = 0, fixed_abs, tag = 'sflag constant byte address 0x0 - dummy sync flag']
  %s0 = inlined_call_operand.vmem [shape: f32[2,54,128], index: 0, kind: input, shape index: {}]
  %s1 = inlined_call_operand.vmem [shape: f32[1,128], index: 1, kind: input, shape index: {}]
  %s2 = inlined_call_operand.vmem [shape: f32[1,128], index: 2, kind: input, shape index: {}]
  %s3 = inlined_call_operand.hbm [shape: f32[896,128], index: 3, kind: input, shape index: {}]
  %s4 = inlined_call_operand.vmem [shape: f32[1,128], index: 4, kind: input, shape index: {}]
  %s5 = inlined_call_operand.vmem [shape: f32[1,128], index: 5, kind: input, shape index: {}]
  %s6 = inlined_call_operand.vmem [shape: f32[1,128], index: 6, kind: input, shape index: {}]
  %s7 = inlined_call_operand.vmem [shape: f32[128,128], index: 7, kind: input, shape index: {}]
  %s8 = inlined_call_operand.vmem [shape: f32[1,128], index: 8, kind: input, shape index: {}]
  %s9 = inlined_call_operand.hbm [shape: f32[2,48,128], index: 9, kind: output, shape index: {}]
  %s10 = sld [smem:[#allocation0]]
  $region106: #{tpu_custom_call.1} parent=0
    _
  %s12 = ssub.s32 1, %s10
  %s13 = scalar_select 0, %s12, %s10
  $region1: #{tpu_custom_call.1} parent=0
    #allocation4 [shape = 'u8[458752]{0}', space=vmem, size = 0x70000, scoped, tag = 'input window, operand 3, single buffered']
    #allocation5 [shape = 's32[2]{0}', space=sflag, size = 0x8, scoped, tag = 'scoped memory for tpu_custom_call.1']
    #allocation6 [shape = 's32[2]{0}', space=sflag, size = 0x8, scoped, tag = 'scoped memory for tpu_custom_call.1']
    #allocation7 [shape = 'u8[16384]{0}', space=vmem, size = 0x4000, scoped, tag = 'output window, operand 0']
    %14 = vsyncpa [#allocation5], 0
    %15 = vsyncpa [#allocation6], 0
    %s16 = scalar_lea.sflag [#allocation6], 1
    %17 = vsyncpa %s16, 0
    loop: start=0, step=1, limit=8
    $region2: #{tpu_custom_call.1} parent=1 // loop_pre_header
      _
    $region3: #{tpu_custom_call.1} parent=1 // loop_header
      %s19 = sphi 0, %s23
      %p20 = scmp.ge.s32.totalorder %s19, 8
      %s26 = sphi 0, %s38
      %s27 = sphi 0, %s34
      %s28 = sphi 0, %s26
      %s29 = sphi 0, %s27
      %s30 = sphi 0, %s28
      %s31 = sphi 0, %s29
      %s39 = sphi 0, %s39
      %s41 = sphi 0, %s39
      %s42 = sphi 0, %s41
      %s56 = sphi 0, %s42
      %s60 = sphi 0, %s60
      %s62 = sphi 0, %s60
      %s63 = sphi 0, %s62
      %s77 = sphi 0, %s63
      %s81 = sphi 0, %s81
      %s83 = sphi 0, %s81
      %s84 = sphi 0, %s83
      %s98 = sphi 0, %s84
      %s102 = sphi 0, %s102
      %s104 = sphi 0, %s102
      %s105 = sphi 0, %s104
      %s119 = sphi 0, %s105
      %s123 = sphi 0, %s123
      %s125 = sphi 0, %s123
      %s126 = sphi 0, %s125
      %s140 = sphi 0, %s126
      %s144 = sphi 0, %s144
      %s146 = sphi 0, %s144
      %s147 = sphi 0, %s146
      %s161 = sphi 0, %s147
      %s165 = sphi 0, %s165
      %s167 = sphi 0, %s165
      %s168 = sphi 0, %s167
      %s182 = sphi 0, %s168
      %s186 = sphi 0, %s186
      %s188 = sphi 0, %s186
      %s189 = sphi 0, %s188
      %s203 = sphi 0, %s189
      %s211 = sphi 0, %s213
      %s214 = sphi 0, %s211
      %s215 = sphi 0, %s214
      %s231 = sphi 0, %s215
    $region4: #{tpu_custom_call.1} parent=1 // loop_header_branch
      %22 = sbr.rel (%p20) target = $region8
    $region5: #{tpu_custom_call.1} parent=1 // loop_body
      %s24 = ssub.s32 %s19, 1
      %s25 = ssub.s32 %s19, 2
      %s32 = sadd.s32 1, %s27
      %p33 = scmp.ge.s32.totalorder %s32, 3
      %s34 = scalar_select %p33, 0, %s32
      %s35 = sadd.s32 1, %s26
      %s36 = scalar_select %p33, %s35, %s26
      %p37 = scmp.ge.s32.totalorder %s36, 2
      %s38 = scalar_select %p37, 0, %s36
      %s40 = sadd.s32 %s39, 1
      %p43 = scmp.eq.s32.totalorder %s19, 5
      %p44 = scmp.ne.s32.totalorder %s39, %s41
      %p45 = scmp.eq.s32.totalorder %s19, 0
      %p46 = por %p44, %p45
      %p47 = scmp.ne.s32.totalorder %s39, %s41
      %p48 = scmp.eq.s32.totalorder %s24, 5
      %p49 = por %p47, %p48
      %p50 = scmp.ne.s32.totalorder %s41, %s42
      %p51 = scmp.eq.s32.totalorder %s24, 0
      %p52 = por %p50, %p51
      %p53 = scmp.ne.s32.totalorder %s41, %s42
      %p54 = scmp.eq.s32.totalorder %s25, 5
      %p55 = por %p53, %p54
      %p57 = scmp.ne.s32.totalorder %s42, %s56
      %p58 = scmp.eq.s32.totalorder %s25, 0
      %p59 = por %p57, %p58
      %s61 = sadd.s32 %s60, 1
      %p64 = scmp.eq.s32.totalorder %s19, 5
      %p65 = scmp.ne.s32.totalorder %s60, %s62
      %p66 = scmp.eq.s32.totalorder %s19, 0
      %p67 = por %p65, %p66
      %p68 = scmp.ne.s32.totalorder %s60, %s62
      %p69 = scmp.eq.s32.totalorder %s24, 5
      %p70 = por %p68, %p69
      %p71 = scmp.ne.s32.totalorder %s62, %s63
      %p72 = scmp.eq.s32.totalorder %s24, 0
      %p73 = por %p71, %p72
      %p74 = scmp.ne.s32.totalorder %s62, %s63
      %p75 = scmp.eq.s32.totalorder %s25, 5
      %p76 = por %p74, %p75
      %p78 = scmp.ne.s32.totalorder %s63, %s77
      %p79 = scmp.eq.s32.totalorder %s25, 0
      %p80 = por %p78, %p79
      %s82 = sadd.s32 %s81, 1
      %p85 = scmp.eq.s32.totalorder %s19, 5
      %p86 = scmp.ne.s32.totalorder %s81, %s83
      %p87 = scmp.eq.s32.totalorder %s19, 0
      %p88 = por %p86, %p87
      %p89 = scmp.ne.s32.totalorder %s81, %s83
      %p90 = scmp.eq.s32.totalorder %s24, 5
      %p91 = por %p89, %p90
      %p92 = scmp.ne.s32.totalorder %s83, %s84
      %p93 = scmp.eq.s32.totalorder %s24, 0
      %p94 = por %p92, %p93
      %p95 = scmp.ne.s32.totalorder %s83, %s84
      %p96 = scmp.eq.s32.totalorder %s25, 5
      %p97 = por %p95, %p96
      %p99 = scmp.ne.s32.totalorder %s84, %s98
      %p100 = scmp.eq.s32.totalorder %s25, 0
      %p101 = por %p99, %p100
      %s103 = sadd.s32 %s102, 1
      %p106 = scmp.eq.s32.totalorder %s19, 5
      %p107 = scmp.ne.s32.totalorder %s102, %s104
      %p108 = scmp.eq.s32.totalorder %s19, 0
      %p109 = por %p107, %p108
      %p110 = scmp.ne.s32.totalorder %s102, %s104
      %p111 = scmp.eq.s32.totalorder %s24, 5
      %p112 = por %p110, %p111
      %p113 = scmp.ne.s32.totalorder %s104, %s105
      %p114 = scmp.eq.s32.totalorder %s24, 0
      %p115 = por %p113, %p114
      %p116 = scmp.ne.s32.totalorder %s104, %s105
      %p117 = scmp.eq.s32.totalorder %s25, 5
      %p118 = por %p116, %p117
      %p120 = scmp.ne.s32.totalorder %s105, %s119
      %p121 = scmp.eq.s32.totalorder %s25, 0
      %p122 = por %p120, %p121
      %s124 = sadd.s32 %s123, 1
      %p127 = scmp.eq.s32.totalorder %s19, 5
      %p128 = scmp.ne.s32.totalorder %s123, %s125
      %p129 = scmp.eq.s32.totalorder %s19, 0
      %p130 = por %p128, %p129
      %p131 = scmp.ne.s32.totalorder %s123, %s125
      %p132 = scmp.eq.s32.totalorder %s24, 5
      %p133 = por %p131, %p132
      %p134 = scmp.ne.s32.totalorder %s125, %s126
      %p135 = scmp.eq.s32.totalorder %s24, 0
      %p136 = por %p134, %p135
      %p137 = scmp.ne.s32.totalorder %s125, %s126
      %p138 = scmp.eq.s32.totalorder %s25, 5
      %p139 = por %p137, %p138
      %p141 = scmp.ne.s32.totalorder %s126, %s140
      %p142 = scmp.eq.s32.totalorder %s25, 0
      %p143 = por %p141, %p142
      %s145 = sadd.s32 %s144, 1
      %p148 = scmp.eq.s32.totalorder %s19, 5
      %p149 = scmp.ne.s32.totalorder %s144, %s146
      %p150 = scmp.eq.s32.totalorder %s19, 0
      %p151 = por %p149, %p150
      %p152 = scmp.ne.s32.totalorder %s144, %s146
      %p153 = scmp.eq.s32.totalorder %s24, 5
      %p154 = por %p152, %p153
      %p155 = scmp.ne.s32.totalorder %s146, %s147
      %p156 = scmp.eq.s32.totalorder %s24, 0
      %p157 = por %p155, %p156
      %p158 = scmp.ne.s32.totalorder %s146, %s147
      %p159 = scmp.eq.s32.totalorder %s25, 5
      %p160 = por %p158, %p159
      %p162 = scmp.ne.s32.totalorder %s147, %s161
      %p163 = scmp.eq.s32.totalorder %s25, 0
      %p164 = por %p162, %p163
      %s166 = sadd.s32 %s165, 1
      %p169 = scmp.eq.s32.totalorder %s19, 5
      %p170 = scmp.ne.s32.totalorder %s165, %s167
      %p171 = scmp.eq.s32.totalorder %s19, 0
      %p172 = por %p170, %p171
      %p173 = scmp.ne.s32.totalorder %s165, %s167
      %p174 = scmp.eq.s32.totalorder %s24, 5
      %p175 = por %p173, %p174
      %p176 = scmp.ne.s32.totalorder %s167, %s168
      %p177 = scmp.eq.s32.totalorder %s24, 0
      %p178 = por %p176, %p177
      %p179 = scmp.ne.s32.totalorder %s167, %s168
      %p180 = scmp.eq.s32.totalorder %s25, 5
      %p181 = por %p179, %p180
      %p183 = scmp.ne.s32.totalorder %s168, %s182
      %p184 = scmp.eq.s32.totalorder %s25, 0
      %p185 = por %p183, %p184
      %s187 = sadd.s32 %s186, 1
      %p190 = scmp.eq.s32.totalorder %s19, 5
      %p191 = scmp.ne.s32.totalorder %s186, %s188
      %p192 = scmp.eq.s32.totalorder %s19, 0
      %p193 = por %p191, %p192
      %p194 = scmp.ne.s32.totalorder %s186, %s188
      %p195 = scmp.eq.s32.totalorder %s24, 5
      %p196 = por %p194, %p195
      %p197 = scmp.ne.s32.totalorder %s188, %s189
      %p198 = scmp.eq.s32.totalorder %s24, 0
      %p199 = por %p197, %p198
      %p200 = scmp.ne.s32.totalorder %s188, %s189
      %p201 = scmp.eq.s32.totalorder %s25, 5
      %p202 = por %p200, %p201
      %p204 = scmp.ne.s32.totalorder %s189, %s203
      %p205 = scmp.eq.s32.totalorder %s25, 0
      %p206 = por %p204, %p205
      %s207 = ssub.s32 %s26, %s38
      %s208 = ssub.s32 %s27, %s34
      %s209 = sor.u32 %s207, %s208
      %p210 = scmp.eq.s32.totalorder %s209, 0
      %s212 = sadd.s32 %s211, 1
      %s213 = scalar_select %p210, %s211, %s212
      %p216 = pneg %p210
      %p217 = scmp.eq.s32.totalorder %s19, 5
      %p218 = por %p216, %p217
      %p219 = scmp.ne.s32.totalorder %s211, %s214
      %p220 = scmp.eq.s32.totalorder %s19, 0
      %p221 = por %p219, %p220
      %p222 = scmp.ne.s32.totalorder %s211, %s214
      %p223 = scmp.eq.s32.totalorder %s24, 5
      %p224 = por %p222, %p223
      %p225 = scmp.ne.s32.totalorder %s214, %s215
      %p226 = scmp.eq.s32.totalorder %s24, 0
      %p227 = por %p225, %p226
      %p228 = scmp.ne.s32.totalorder %s214, %s215
      %p229 = scmp.eq.s32.totalorder %s25, 5
      %p230 = por %p228, %p229
      %p232 = scmp.ne.s32.totalorder %s215, %s231
      %p233 = scmp.eq.s32.totalorder %s25, 0
      %p234 = por %p232, %p233
      %p235 = scmp.le.s32.totalorder 1, %s19
      %p236 = scmp.lt.s32.totalorder %s19, 7
      %p237 = pnand %p235, %p236
      %p238 = pneg %p237
      // Predicated region
      $region9: #{tpu_custom_call.1} parent=5 // pred_check
        _
      $region10: #{tpu_custom_call.1} parent=5 // pred_check_branch
        %240 = sbr.rel (%p237) target = $region12
      $region11: #{tpu_custom_call.1} parent=5 // pred_region
        %s241 = ssub.s32 %s19, 1
        // Predicated region
        $region13: #{tpu_custom_call.1} parent=11 // pred_check
          %p242 = pneg %p52
        $region14: #{tpu_custom_call.1} parent=11 // pred_check_branch
          %244 = sbr.rel (%p242) target = $region16
        $region15: #{tpu_custom_call.1} parent=11 // pred_region
          _
        $region16: #{tpu_custom_call.1} parent=11 // pred_fallthru
          _
        // Predicated region
        $region17: #{tpu_custom_call.1} parent=11 // pred_check
          %p245 = pneg %p73
        $region18: #{tpu_custom_call.1} parent=11 // pred_check_branch
          %247 = sbr.rel (%p245) target = $region20
        $region19: #{tpu_custom_call.1} parent=11 // pred_region
          _
        $region20: #{tpu_custom_call.1} parent=11 // pred_fallthru
          _
        // Predicated region
        $region21: #{tpu_custom_call.1} parent=11 // pred_check
          %p248 = pneg %p94
        $region22: #{tpu_custom_call.1} parent=11 // pred_check_branch
          %250 = sbr.rel (%p248) target = $region24
        $region23: #{tpu_custom_call.1} parent=11 // pred_region
          %s252 = ssub.s32 14336, 14336
          %253 = vsyncadd [#allocation5], %s252
          %s254 = sshll.u32 [#allocation4], 4
          %s255 = int_to_ptr.vmem [resolvable:$true] %s254
          %260 = dma.hbm_to_vmem [thread:$0]  %s3, 14336, %s255, [#allocation5], 128, 128, 8
        $region24: #{tpu_custom_call.1} parent=11 // pred_fallthru
          _
        // Predicated region
        $region25: #{tpu_custom_call.1} parent=11 // pred_check
          %p261 = pneg %p115
        $region26: #{tpu_custom_call.1} parent=11 // pred_check_branch
          %263 = sbr.rel (%p261) target = $region28
        $region27: #{tpu_custom_call.1} parent=11 // pred_region
          _
        $region28: #{tpu_custom_call.1} parent=11 // pred_fallthru
          _
        // Predicated region
        $region29: #{tpu_custom_call.1} parent=11 // pred_check
          %p264 = pneg %p136
        $region30: #{tpu_custom_call.1} parent=11 // pred_check_branch
          %266 = sbr.rel (%p264) target = $region32
        $region31: #{tpu_custom_call.1} parent=11 // pred_region
          _
        $region32: #{tpu_custom_call.1} parent=11 // pred_fallthru
          _
        // Predicated region
        $region33: #{tpu_custom_call.1} parent=11 // pred_check
          %p267 = pneg %p157
        $region34: #{tpu_custom_call.1} parent=11 // pred_check_branch
          %269 = sbr.rel (%p267) target = $region36
        $region35: #{tpu_custom_call.1} parent=11 // pred_region
          _
        $region36: #{tpu_custom_call.1} parent=11 // pred_fallthru
          _
        // Predicated region
        $region37: #{tpu_custom_call.1} parent=11 // pred_check
          %p270 = pneg %p178
        $region38: #{tpu_custom_call.1} parent=11 // pred_check_branch
          %272 = sbr.rel (%p270) target = $region40
        $region39: #{tpu_custom_call.1} parent=11 // pred_region
          _
        $region40: #{tpu_custom_call.1} parent=11 // pred_fallthru
          _
        // Predicated region
        $region41: #{tpu_custom_call.1} parent=11 // pred_check
          %p273 = pneg %p199
        $region42: #{tpu_custom_call.1} parent=11 // pred_check_branch
          %275 = sbr.rel (%p273) target = $region44
        $region43: #{tpu_custom_call.1} parent=11 // pred_region
          _
        $region44: #{tpu_custom_call.1} parent=11 // pred_fallthru
          _
      $region12: #{tpu_custom_call.1} parent=5 // pred_fallthru
        _
      %p276 = scmp.lt.s32.totalorder %s19, 6
      // Predicated region
      $region45: #{tpu_custom_call.1} parent=5 // pred_check
        %p277 = pneg %p276
      $region46: #{tpu_custom_call.1} parent=5 // pred_check_branch
        %279 = sbr.rel (%p277) target = $region48
      $region47: #{tpu_custom_call.1} parent=5 // pred_region
        _
      $region48: #{tpu_custom_call.1} parent=5 // pred_fallthru
        _
      %p280 = scmp.le.s32.totalorder 1, %s19
      %p281 = scmp.lt.s32.totalorder %s19, 7
      %p282 = pnand %p280, %p281
      %p283 = pneg %p282
      // Predicated region
      $region49: #{tpu_custom_call.1} parent=5 // pred_check
        _
      $region50: #{tpu_custom_call.1} parent=5 // pred_check_branch
        %285 = sbr.rel (%p282) target = $region52
      $region51: #{tpu_custom_call.1} parent=5 // pred_region
        %s286 = ssub.s32 %s19, 1
        // Predicated region
        $region53: #{tpu_custom_call.1} parent=51 // pred_check
          %p287 = pneg %p94
        $region54: #{tpu_custom_call.1} parent=51 // pred_check_branch
          %289 = sbr.rel (%p287) target = $region56
        $region55: #{tpu_custom_call.1} parent=51 // pred_region
          %290 = dma.done [#allocation5], 14336
        $region56: #{tpu_custom_call.1} parent=51 // pred_fallthru
          _
        %p291 = pneg %p52
        %p292 = pneg %p49
        %p293 = pneg %p73
        %p294 = pneg %p70
        %p295 = pneg %p94
        %p296 = pneg %p91
        %p297 = pneg %p115
        %p298 = pneg %p112
        %p299 = pneg %p136
        %p300 = pneg %p133
        %p301 = pneg %p157
        %p302 = pneg %p154
        %p303 = pneg %p178
        %p304 = pneg %p175
        %p305 = pneg %p199
        %p306 = pneg %p196
        %p307 = pneg %p227
        %p308 = pneg %p224
        %s309 = sand.u32 %s214, 1
        %s310 = scalar_lea.sflag [#allocation6], %s309
        %s311 = sand.u32 %s214, 1
        %s312 = smul.addr %s311, 16
        %s313 = scalar_lea.vmem [#allocation7], %s312
        %s314 = smul.u32 2, %s29
        %s315 = smul.u32 %s29, 16
        %s316 = smul.u32 %s28, 56
        %s317 = sadd.s32 %s315, %s316
        %s318 = scalar_lea.vmem %s0, %s317
        %p320 = scmp.lt.u32.totalorder 22, 8
        %p321 = pneg %p320
        // Predicated region
        $region57: #{tpu_custom_call.1} parent=51 // pred_check
          _
        $region58: #{tpu_custom_call.1} parent=51 // pred_check_branch
          %323 = sbr.rel (%p320) target = $region60
        $region59: #{tpu_custom_call.1} parent=51 // pred_region
          %s338 = sand.u32 22, 7
          %p339 = scmp.eq.s32.totalorder %s338, 0
          %p340 = pneg %p339
          // Predicated region
          $region72: #{tpu_custom_call.1} parent=59 // pred_check
            _
          $region73: #{tpu_custom_call.1} parent=59 // pred_check_branch
            %342 = sbr.rel (%p339) target = $region75
          $region74: #{tpu_custom_call.1} parent=59 // pred_region
            %s343 = sand.u32 22, 7
            %s344 = ssub.s32 22, %s343
            %s345 = scalar_lea.vmem %s318, %s344
            %s346 = ssub.s32 22, %s343
            %s347 = scalar_lea.vmem [#allocation2], %s346
            loop: start=0, step=1, limit=1
            $region76: #{tpu_custom_call.1} parent=74 // loop_pre_header
              _
            $region77: #{tpu_custom_call.1} parent=74 // loop_header
              %s349 = sphi 0, %s353
              %p350 = scmp.ge.s32.totalorder %s349, 1
              %s354 = sphi %s318, %s318
              %s355 = sphi [#allocation2], [#allocation2]
            $region78: #{tpu_custom_call.1} parent=74 // loop_header_branch
              %352 = sbr.rel (%p350) target = $region82
            $region79: #{tpu_custom_call.1} parent=74 // loop_body
              %v356 = vld [vmem:[%s354] sm:$0xff]
              %357 = vst [vmem:[%s355] sm:$0xff] %v356
              %v358 = vld [vmem:[%s354 + $0x8] sm:$0xff]
              %359 = vst [vmem:[%s355 + $0x8] sm:$0xff] %v358
            $region80: #{tpu_custom_call.1} parent=74 // loop_footer
              %s353 = sadd.s32 1, %s349
            $region81: #{tpu_custom_call.1} parent=74 // loop_footer_branch
              %348 = sbr.rel target = $region77
            $region82: #{tpu_custom_call.1} parent=74 // loop_exit
              _
            %s360 = sshllo.u32 0, %s343
            loop: start=0, step=1, limit=1
            $region83: #{tpu_custom_call.1} parent=74 // loop_pre_header
              _
            $region84: #{tpu_custom_call.1} parent=74 // loop_header
              %s362 = sphi 0, %s366
              %p363 = scmp.ge.s32.totalorder %s362, 1
              %s367 = sphi %s345, %s345
              %s368 = sphi %s347, %s347
            $region85: #{tpu_custom_call.1} parent=74 // loop_header_branch
              %365 = sbr.rel (%p363) target = $region89
            $region86: #{tpu_custom_call.1} parent=74 // loop_body
              %v369 = vld [vmem:[%s367] sm:%s360]
              %370 = vst [vmem:[%s368] sm:%s360] %v369
            $region87: #{tpu_custom_call.1} parent=74 // loop_footer
              %s366 = sadd.s32 1, %s362
            $region88: #{tpu_custom_call.1} parent=74 // loop_footer_branch
              %361 = sbr.rel target = $region84
            $region89: #{tpu_custom_call.1} parent=74 // loop_exit
              _
          $region75: #{tpu_custom_call.1} parent=59 // pred_fallthru
            _
        $region60: #{tpu_custom_call.1} parent=51 // pred_fallthru
          _
        // Predicated region
        $region61: #{tpu_custom_call.1} parent=51 // pred_check
          %p324 = pneg %p320
        $region62: #{tpu_custom_call.1} parent=51 // pred_check_branch
          %326 = sbr.rel (%p324) target = $region64
        $region63: #{tpu_custom_call.1} parent=51 // pred_region
          %s327 = sshllo.u32 0, 22
          loop: start=0, step=1, limit=1
          $region65: #{tpu_custom_call.1} parent=63 // loop_pre_header
            _
          $region66: #{tpu_custom_call.1} parent=63 // loop_header
            %s329 = sphi 0, %s333
            %p330 = scmp.ge.s32.totalorder %s329, 1
            %s334 = sphi %s318, %s318
            %s335 = sphi [#allocation2], [#allocation2]
          $region67: #{tpu_custom_call.1} parent=63 // loop_header_branch
            %332 = sbr.rel (%p330) target = $region71
          $region68: #{tpu_custom_call.1} parent=63 // loop_body
            %v336 = vld [vmem:[%s334] sm:%s327]
            %337 = vst [vmem:[%s335] sm:%s327] %v336
          $region69: #{tpu_custom_call.1} parent=63 // loop_footer
            %s333 = sadd.s32 1, %s329
          $region70: #{tpu_custom_call.1} parent=63 // loop_footer_branch
            %328 = sbr.rel target = $region66
          $region71: #{tpu_custom_call.1} parent=63 // loop_exit
            _
        $region64: #{tpu_custom_call.1} parent=51 // pred_fallthru
          _
        // Predicated region
        $region90: #{tpu_custom_call.1} parent=51 // pred_check
          _
        $region91: #{tpu_custom_call.1} parent=51 // pred_check_branch
          %373 = sbr.rel (0) target = $region93
        $region92: #{tpu_custom_call.1} parent=51 // pred_region
          %374 = vsyncadd [#allocation3], 352
        $region93: #{tpu_custom_call.1} parent=51 // pred_fallthru
          _
        %s375 = smul.u32 22, 1
        %s376 = sshll.u32 %s375, 4
        %377 = dma.done [#allocation3], %s376
        %v378 = vld [vmem:[#allocation2] sm:$0xff]
        %v379 = vld [vmem:[#allocation2 + $0x8] sm:$0xff]
        %v380 = vld [vmem:[#allocation2 + $0x10] sm:$0x3f]
        %v381 = vld [vmem:[%s1] sm:$0x1]
        %v383 = vlaneseq
        %v384 = vshrl.u32 %v383, 7
        %v385 = vsub.s32 0, %v384
        %v386 = vrot.slane %v381, %v385
        %v388 = vmul.f32 %v378, %v386
        %v389 = vmul.f32 %v379, %v386
        %v390 = vmul.f32 %v380, %v386
        %v391 = vand.u32 2147483647, %v388
        %vm392 = vcmp.le.f32.partialorder %v391, 0.7853982
        %vm393 = vcmp.lt.s32.totalorder %v388, 0
        %v394 = vand.u32 %v388, 2139095040
        %v395 = vshrl.u32 %v394, 23
        %v396 = vsub.s32 %v395, 127
        %v397 = vand.u32 2147483647, %v388
        %v398 = vand.u32 %v397, 8388607
        %v399 = vor.u32 %v398, 8388608
        %v400 = vsub.s32 0, %v399
        %v401 = vadd.s32 %v396, 1
        %vm402 = vcmp.gt.s32.totalorder %v401, 0
        %v403 = vsel %vm402, %v401, 0
        %v404 = vshrl.u32 %v403, 5
        %v405 = vand.u32 %v403, 31
        %v406 = vsub.s32 32, %v405
        %v407 = vshrl.u32 683565275, %v406
        %v408 = vshll.u32 683565275, %v405
        %v409 = vshrl.u32 2475754826, %v406
        %v410 = vor.u32 %v408, %v409
        %v411 = vshll.u32 2475754826, %v405
        %v412 = vshrl.u32 2131351028, %v406
        %v413 = vor.u32 %v411, %v412
        %v414 = vshll.u32 2131351028, %v405
        %v415 = vshrl.u32 2102212464, %v406
        %v416 = vor.u32 %v414, %v415
        %v417 = vshll.u32 2102212464, %v405
        %v418 = vshrl.u32 920167782, %v406
        %v419 = vor.u32 %v417, %v418
        %v420 = vshll.u32 920167782, %v405
        %v421 = vshrl.u32 1326507024, %v406
        %v422 = vor.u32 %v420, %v421
        %vm423 = vcmp.lt.s32.totalorder %v404, 1
        %vm424 = vcmp.lt.s32.totalorder %v404, 2
        %vm425 = vcmp.lt.s32.totalorder %v404, 3
        %vm426 = vcmp.lt.s32.totalorder %v404, 4
        %v427 = vsel %vm423, %v407, %v410
        %v428 = vsel %vm426, %v416, 2102212464
        %v429 = vsel %vm425, %v413, %v428
        %v430 = vsel %vm424, %v427, %v429
        %v431 = vsel %vm423, %v410, %v413
        %v432 = vsel %vm426, %v419, 920167782
        %v433 = vsel %vm425, %v416, %v432
        %v434 = vsel %vm424, %v431, %v433
        %v435 = vsel %vm423, %v413, %v416
        %v436 = vsel %vm426, %v422, 1326507024
        %v437 = vsel %vm425, %v419, %v436
        %v438 = vsel %vm424, %v435, %v437
        %v439 = vshll.u32 %v399, 8
        %v440 = vmul.u32.u64.compose %v439, %v438
        %v441 = vextract.low.u32 %v440
        %v442 = vextract.high.u32 %v440
        %v443 = vmul.u32.u64.compose %v439, %v434
        %v444 = vextract.low.u32 %v443
        %v445 = vextract.high.u32 %v443
        %v446 = vmul.u32 %v439, %v430
        %v447 = vadd.s32 %v442, %v444
        %vm448 = vc.u32 %v442, %v444
        %v449 = vadd.s32 %v445, 1
        %v450 = vsel %vm448, %v449, %v445
        %v451 = vadd.s32 %v446, %v450
        %v452 = vadd.s32 %v451, 536870912
        %v453 = vshrl.u32 %v452, 30
        %v454 = vshll.u32 %v453, 30
        %v455 = vsub.s32 %v451, %v454
        %vm456 = vcmp.lt.s32.totalorder %v455, 0
        %v457 = vsub.s32 0, %v455
        %v458 = vsel %vm456, %v457, %v455
        %v459 = vclz %v458
        %v460 = vsub.s32 %v459, 2
        %vm461 = vcmp.gt.s32.totalorder 0, %v460
        %v462 = vsel %vm461, 0, %v460
        %v463 = vsub.s32 32, %v462
        %v464 = vshll.u32 %v455, %v462
        %v465 = vshrl.u32 %v447, %v463
        %v466 = vor.u32 %v464, %v465
        %v467 = vsub.s32 4294967266, %v462
        %v468 = vadd.s32 %v467, 127
        %v469 = vshll.u32 %v468, 23
        %v470 = vor.u32 4788187, %v469
        %v471 = vand.u32 2147483647, %v470
        %v473 = vcvt.s32.f32 %v466
        %v474 = vmul.f32 %v473, %v471
        %v475 = vxor.u32 %v474, 2147483648
        %v476 = vsel %vm393, %v475, %v474
        %v477 = vsub.s32 4, %v453
        %v478 = vsel %vm393, %v477, %v453
        %v479 = vsel %vm392, %v388, %v476
        %v480 = vsel %vm392, 0, %v478
        %v481 = vcosq.f32.pop %v479
        %v482 = vsinq.f32.pop %v479
        %vm483 = vweird.f32 %v388
        %v484 = vadd.s32 %v480, 3
        %v485 = vand.u32 %v484, 3
        %vm486 = vcmp.lt.s32.totalorder %v485, 2
        %vm487 = vcmp.eq.s32.totalorder %v485, 0
        %v488 = vxor.u32 %v482, 2147483648
        %v489 = vsel %vm487, %v481, %v488
        %vm490 = vcmp.eq.s32.totalorder %v485, 2
        %v491 = vxor.u32 %v481, 2147483648
        %v492 = vsel %vm490, %v491, %v482
        %v493 = vsel %vm486, %v489, %v492
        %v494 = vsel %vm483, nan, %v493
        %v495 = vand.u32 2147483647, %v389
        %vm496 = vcmp.le.f32.partialorder %v495, 0.7853982
        %vm497 = vcmp.lt.s32.totalorder %v389, 0
        %v498 = vand.u32 %v389, 2139095040
        %v499 = vshrl.u32 %v498, 23
        %v500 = vsub.s32 %v499, 127
        %v501 = vand.u32 2147483647, %v389
        %v502 = vand.u32 %v501, 8388607
        %v503 = vor.u32 %v502, 8388608
        %v504 = vsub.s32 0, %v503
        %v505 = vadd.s32 %v500, 1
        %vm506 = vcmp.gt.s32.totalorder %v505, 0
        %v507 = vsel %vm506, %v505, 0
        %v508 = vshrl.u32 %v507, 5
        %v509 = vand.u32 %v507, 31
        %v510 = vsub.s32 32, %v509
        %v511 = vshrl.u32 683565275, %v510
        %v512 = vshll.u32 683565275, %v509
        %v513 = vshrl.u32 2475754826, %v510
        %v514 = vor.u32 %v512, %v513
        %v515 = vshll.u32 2475754826, %v509
        %v516 = vshrl.u32 2131351028, %v510
        %v517 = vor.u32 %v515, %v516
        %v518 = vshll.u32 2131351028, %v509
        %v519 = vshrl.u32 2102212464, %v510
        %v520 = vor.u32 %v518, %v519
        %v521 = vshll.u32 2102212464, %v509
        %v522 = vshrl.u32 920167782, %v510
        %v523 = vor.u32 %v521, %v522
        %v524 = vshll.u32 920167782, %v509
        %v525 = vshrl.u32 1326507024, %v510
        %v526 = vor.u32 %v524, %v525
        %vm527 = vcmp.lt.s32.totalorder %v508, 1
        %vm528 = vcmp.lt.s32.totalorder %v508, 2
        %vm529 = vcmp.lt.s32.totalorder %v508, 3
        %vm530 = vcmp.lt.s32.totalorder %v508, 4
        %v531 = vsel %vm527, %v511, %v514
        %v532 = vsel %vm530, %v520, 2102212464
        %v533 = vsel %vm529, %v517, %v532
        %v534 = vsel %vm528, %v531, %v533
        %v535 = vsel %vm527, %v514, %v517
        %v536 = vsel %vm530, %v523, 920167782
        %v537 = vsel %vm529, %v520, %v536
        %v538 = vsel %vm528, %v535, %v537
        %v539 = vsel %vm527, %v517, %v520
        %v540 = vsel %vm530, %v526, 1326507024
        %v541 = vsel %vm529, %v523, %v540
        %v542 = vsel %vm528, %v539, %v541
        %v543 = vshll.u32 %v503, 8
        %v544 = vmul.u32.u64.compose %v543, %v542
        %v545 = vextract.low.u32 %v544
        %v546 = vextract.high.u32 %v544
        %v547 = vmul.u32.u64.compose %v543, %v538
        %v548 = vextract.low.u32 %v547
        %v549 = vextract.high.u32 %v547
        %v550 = vmul.u32 %v543, %v534
        %v551 = vadd.s32 %v546, %v548
        %vm552 = vc.u32 %v546, %v548
        %v553 = vadd.s32 %v549, 1
        %v554 = vsel %vm552, %v553, %v549
        %v555 = vadd.s32 %v550, %v554
        %v556 = vadd.s32 %v555, 536870912
        %v557 = vshrl.u32 %v556, 30
        %v558 = vshll.u32 %v557, 30
        %v559 = vsub.s32 %v555, %v558
        %vm560 = vcmp.lt.s32.totalorder %v559, 0
        %v561 = vsub.s32 0, %v559
        %v562 = vsel %vm560, %v561, %v559
        %v563 = vclz %v562
        %v564 = vsub.s32 %v563, 2
        %vm565 = vcmp.gt.s32.totalorder 0, %v564
        %v566 = vsel %vm565, 0, %v564
        %v567 = vsub.s32 32, %v566
        %v568 = vshll.u32 %v559, %v566
        %v569 = vshrl.u32 %v551, %v567
        %v570 = vor.u32 %v568, %v569
        %v571 = vsub.s32 4294967266, %v566
        %v572 = vadd.s32 %v571, 127
        %v573 = vshll.u32 %v572, 23
        %v574 = vor.u32 4788187, %v573
        %v575 = vand.u32 2147483647, %v574
        %v577 = vcvt.s32.f32 %v570
        %v578 = vmul.f32 %v577, %v575
        %v579 = vxor.u32 %v578, 2147483648
        %v580 = vsel %vm497, %v579, %v578
        %v581 = vsub.s32 4, %v557
        %v582 = vsel %vm497, %v581, %v557
        %v583 = vsel %vm496, %v389, %v580
        %v584 = vsel %vm496, 0, %v582
        %v585 = vcosq.f32.pop %v583
        %v586 = vsinq.f32.pop %v583
        %vm587 = vweird.f32 %v389
        %v588 = vadd.s32 %v584, 3
        %v589 = vand.u32 %v588, 3
        %vm590 = vcmp.lt.s32.totalorder %v589, 2
        %vm591 = vcmp.eq.s32.totalorder %v589, 0
        %v592 = vxor.u32 %v586, 2147483648
        %v593 = vsel %vm591, %v585, %v592
        %vm594 = vcmp.eq.s32.totalorder %v589, 2
        %v595 = vxor.u32 %v585, 2147483648
        %v596 = vsel %vm594, %v595, %v586
        %v597 = vsel %vm590, %v593, %v596
        %v598 = vsel %vm587, nan, %v597
        %v599 = vand.u32 2147483647, %v390
        %vm600 = vcmp.le.f32.partialorder %v599, 0.7853982
        %vm601 = vcmp.lt.s32.totalorder %v390, 0
        %v602 = vand.u32 %v390, 2139095040
        %v603 = vshrl.u32 %v602, 23
        %v604 = vsub.s32 %v603, 127
        %v605 = vand.u32 2147483647, %v390
        %v606 = vand.u32 %v605, 8388607
        %v607 = vor.u32 %v606, 8388608
        %v608 = vsub.s32 0, %v607
        %v609 = vadd.s32 %v604, 1
        %vm610 = vcmp.gt.s32.totalorder %v609, 0
        %v611 = vsel %vm610, %v609, 0
        %v612 = vshrl.u32 %v611, 5
        %v613 = vand.u32 %v611, 31
        %v614 = vsub.s32 32, %v613
        %v615 = vshrl.u32 683565275, %v614
        %v616 = vshll.u32 683565275, %v613
        %v617 = vshrl.u32 2475754826, %v614
        %v618 = vor.u32 %v616, %v617
        %v619 = vshll.u32 2475754826, %v613
        %v620 = vshrl.u32 2131351028, %v614
        %v621 = vor.u32 %v619, %v620
        %v622 = vshll.u32 2131351028, %v613
        %v623 = vshrl.u32 2102212464, %v614
        %v624 = vor.u32 %v622, %v623
        %v625 = vshll.u32 2102212464, %v613
        %v626 = vshrl.u32 920167782, %v614
        %v627 = vor.u32 %v625, %v626
        %v628 = vshll.u32 920167782, %v613
        %v629 = vshrl.u32 1326507024, %v614
        %v630 = vor.u32 %v628, %v629
        %vm631 = vcmp.lt.s32.totalorder %v612, 1
        %vm632 = vcmp.lt.s32.totalorder %v612, 2
        %vm633 = vcmp.lt.s32.totalorder %v612, 3
        %vm634 = vcmp.lt.s32.totalorder %v612, 4
        %v635 = vsel %vm631, %v615, %v618
        %v636 = vsel %vm634, %v624, 2102212464
        %v637 = vsel %vm633, %v621, %v636
        %v638 = vsel %vm632, %v635, %v637
        %v639 = vsel %vm631, %v618, %v621
        %v640 = vsel %vm634, %v627, 920167782
        %v641 = vsel %vm633, %v624, %v640
        %v642 = vsel %vm632, %v639, %v641
        %v643 = vsel %vm631, %v621, %v624
        %v644 = vsel %vm634, %v630, 1326507024
        %v645 = vsel %vm633, %v627, %v644
        %v646 = vsel %vm632, %v643, %v645
        %v647 = vshll.u32 %v607, 8
        %v648 = vmul.u32.u64.compose %v647, %v646
        %v649 = vextract.low.u32 %v648
        %v650 = vextract.high.u32 %v648
        %v651 = vmul.u32.u64.compose %v647, %v642
        %v652 = vextract.low.u32 %v651
        %v653 = vextract.high.u32 %v651
        %v654 = vmul.u32 %v647, %v638
        %v655 = vadd.s32 %v650, %v652
        %vm656 = vc.u32 %v650, %v652
        %v657 = vadd.s32 %v653, 1
        %v658 = vsel %vm656, %v657, %v653
        %v659 = vadd.s32 %v654, %v658
        %v660 = vadd.s32 %v659, 536870912
        %v661 = vshrl.u32 %v660, 30
        %v662 = vshll.u32 %v661, 30
        %v663 = vsub.s32 %v659, %v662
        %vm664 = vcmp.lt.s32.totalorder %v663, 0
        %v665 = vsub.s32 0, %v663
        %v666 = vsel %vm664, %v665, %v663
        %v667 = vclz %v666
        %v668 = vsub.s32 %v667, 2
        %vm669 = vcmp.gt.s32.totalorder 0, %v668
        %v670 = vsel %vm669, 0, %v668
        %v671 = vsub.s32 32, %v670
        %v672 = vshll.u32 %v663, %v670
        %v673 = vshrl.u32 %v655, %v671
        %v674 = vor.u32 %v672, %v673
        %v675 = vsub.s32 4294967266, %v670
        %v676 = vadd.s32 %v675, 127
        %v677 = vshll.u32 %v676, 23
        %v678 = vor.u32 4788187, %v677
        %v679 = vand.u32 2147483647, %v678
        %v681 = vcvt.s32.f32 %v674
        %v682 = vmul.f32 %v681, %v679
        %v683 = vxor.u32 %v682, 2147483648
        %v684 = vsel %vm601, %v683, %v682
        %v685 = vsub.s32 4, %v661
        %v686 = vsel %vm601, %v685, %v661
        %v687 = vsel %vm600, %v390, %v684
        %v688 = vsel %vm600, 0, %v686
        %v689 = vcosq.f32.pop %v687
        %v690 = vsinq.f32.pop %v687
        %vm691 = vweird.f32 %v390
        %v692 = vadd.s32 %v688, 3
        %v693 = vand.u32 %v692, 3
        %vm694 = vcmp.lt.s32.totalorder %v693, 2
        %vm695 = vcmp.eq.s32.totalorder %v693, 0
        %v696 = vxor.u32 %v690, 2147483648
        %v697 = vsel %vm695, %v689, %v696
        %vm698 = vcmp.eq.s32.totalorder %v693, 2
        %v699 = vxor.u32 %v689, 2147483648
        %v700 = vsel %vm698, %v699, %v690
        %v701 = vsel %vm694, %v697, %v700
        %v702 = vsel %vm691, nan, %v701
        %v703 = vld [vmem:[%s2] sm:$0x1]
        %v704 = vmul.f32 %v494, %v494
        %v705 = vmul.f32 %v598, %v598
        %v706 = vmul.f32 %v702, %v702
        %v708 = vlaneseq
        %v709 = vshrl.u32 %v708, 7
        %v710 = vsub.s32 0, %v709
        %v711 = vrot.slane %v703, %v710
        %v713 = vmul.f32 %v711, %v704
        %v714 = vmul.f32 %v711, %v705
        %v715 = vmul.f32 %v711, %v706
        %v716 = vadd.f32 %v378, %v713
        %v717 = vadd.f32 %v379, %v714
        %v718 = vadd.f32 %v380, %v715
        %vm722 = vcmask 1046528
        %v723 = vrot.slane %v716, 1
        %v724 = vrot.slane %v717, 1
        %v725 = vsel %vm722, %v723, %v724
        %v726 = vrot.slane %v718, 1
        %v727 = vsel %vm722, %v724, %v726
        %vm730 = vcmask 1045504
        %v731 = vrot.slane %v716, 2
        %v732 = vrot.slane %v717, 2
        %v733 = vsel %vm730, %v731, %v732
        %v734 = vrot.slane %v718, 2
        %v735 = vsel %vm730, %v732, %v734
        %vm738 = vcmask 1044480
        %v739 = vrot.slane %v716, 3
        %v740 = vrot.slane %v717, 3
        %v741 = vsel %vm738, %v739, %v740
        %v742 = vrot.slane %v718, 3
        %v743 = vsel %vm738, %v740, %v742
        %vm746 = vcmask 1043456
        %v747 = vrot.slane %v716, 4
        %v748 = vrot.slane %v717, 4
        %v749 = vsel %vm746, %v747, %v748
        %v750 = vrot.slane %v718, 4
        %v751 = vsel %vm746, %v748, %v750
        %vm754 = vcmask 1042432
        %v755 = vrot.slane %v716, 5
        %v756 = vrot.slane %v717, 5
        %v757 = vsel %vm754, %v755, %v756
        %v758 = vrot.slane %v718, 5
        %v759 = vsel %vm754, %v756, %v758
        %vm762 = vcmask 1041408
        %v763 = vrot.slane %v716, 6
        %v764 = vrot.slane %v717, 6
        %v765 = vsel %vm762, %v763, %v764
        %v766 = vrot.slane %v718, 6
        %v767 = vsel %vm762, %v764, %v766
        %v770 = vld [vmem:[#allocation4] sm:$0xff]
        %v771 = vld [vmem:[#allocation4 + $0x8] sm:$0xff]
        %v772 = vld [vmem:[#allocation4 + $0x10] sm:$0xff]
        %v773 = vld [vmem:[#allocation4 + $0x18] sm:$0xff]
        %v774 = vld [vmem:[#allocation4 + $0x20] sm:$0xff]
        %v775 = vld [vmem:[#allocation4 + $0x28] sm:$0xff]
        %v776 = vld [vmem:[#allocation4 + $0x30] sm:$0xff]
        %v777 = vld [vmem:[#allocation4 + $0x38] sm:$0xff]
        %v778 = vld [vmem:[#allocation4 + $0x40] sm:$0xff]
        %v779 = vld [vmem:[#allocation4 + $0x48] sm:$0xff]
        %v780 = vld [vmem:[#allocation4 + $0x50] sm:$0xff]
        %v781 = vld [vmem:[#allocation4 + $0x58] sm:$0xff]
        %v782 = vld [vmem:[#allocation4 + $0x60] sm:$0xff]
        %v783 = vld [vmem:[#allocation4 + $0x68] sm:$0xff]
        %v784 = vld [vmem:[#allocation4 + $0x70] sm:$0xff]
        %v785 = vld [vmem:[#allocation4 + $0x78] sm:$0xff]
        %v786 = vld [vmem:[#allocation4 + $0x80] sm:$0xff]
        %v787 = vld [vmem:[#allocation4 + $0x88] sm:$0xff]
        %v788 = vld [vmem:[#allocation4 + $0x90] sm:$0xff]
        %v789 = vld [vmem:[#allocation4 + $0x98] sm:$0xff]
        %v790 = vld [vmem:[#allocation4 + $0xa0] sm:$0xff]
        %v791 = vld [vmem:[#allocation4 + $0xa8] sm:$0xff]
        %v792 = vld [vmem:[#allocation4 + $0xb0] sm:$0xff]
        %v793 = vld [vmem:[#allocation4 + $0xb8] sm:$0xff]
        %v794 = vld [vmem:[#allocation4 + $0xc0] sm:$0xff]
        %v795 = vld [vmem:[#allocation4 + $0xc8] sm:$0xff]
        %v796 = vld [vmem:[#allocation4 + $0xd0] sm:$0xff]
        %v797 = vld [vmem:[#allocation4 + $0xd8] sm:$0xff]
        %v798 = vld [vmem:[#allocation4 + $0xe0] sm:$0xff]
        %v799 = vld [vmem:[#allocation4 + $0xe8] sm:$0xff]
        %v800 = vld [vmem:[#allocation4 + $0xf0] sm:$0xff]
        %v801 = vld [vmem:[#allocation4 + $0xf8] sm:$0xff]
        %v802 = vld [vmem:[#allocation4 + $0x100] sm:$0xff]
        %v803 = vld [vmem:[#allocation4 + $0x108] sm:$0xff]
        %v804 = vld [vmem:[#allocation4 + $0x110] sm:$0xff]
        %v805 = vld [vmem:[#allocation4 + $0x118] sm:$0xff]
        %v806 = vld [vmem:[#allocation4 + $0x120] sm:$0xff]
        %v807 = vld [vmem:[#allocation4 + $0x128] sm:$0xff]
        %v808 = vld [vmem:[#allocation4 + $0x130] sm:$0xff]
        %v809 = vld [vmem:[#allocation4 + $0x138] sm:$0xff]
        %v810 = vld [vmem:[#allocation4 + $0x140] sm:$0xff]
        %v811 = vld [vmem:[#allocation4 + $0x148] sm:$0xff]
        %v812 = vld [vmem:[#allocation4 + $0x150] sm:$0xff]
        %v813 = vld [vmem:[#allocation4 + $0x158] sm:$0xff]
        %v814 = vld [vmem:[#allocation4 + $0x160] sm:$0xff]
        %v815 = vld [vmem:[#allocation4 + $0x168] sm:$0xff]
        %v816 = vld [vmem:[#allocation4 + $0x170] sm:$0xff]
        %v817 = vld [vmem:[#allocation4 + $0x178] sm:$0xff]
        %v818 = vld [vmem:[#allocation4 + $0x180] sm:$0xff]
        %v819 = vld [vmem:[#allocation4 + $0x188] sm:$0xff]
        %v820 = vld [vmem:[#allocation4 + $0x190] sm:$0xff]
        %v821 = vld [vmem:[#allocation4 + $0x198] sm:$0xff]
        %v822 = vld [vmem:[#allocation4 + $0x1a0] sm:$0xff]
        %v823 = vld [vmem:[#allocation4 + $0x1a8] sm:$0xff]
        %v824 = vld [vmem:[#allocation4 + $0x1b0] sm:$0xff]
        %v825 = vld [vmem:[#allocation4 + $0x1b8] sm:$0xff]
        %v826 = vld [vmem:[#allocation4 + $0x1c0] sm:$0xff]
        %v827 = vld [vmem:[#allocation4 + $0x1c8] sm:$0xff]
        %v828 = vld [vmem:[#allocation4 + $0x1d0] sm:$0xff]
        %v829 = vld [vmem:[#allocation4 + $0x1d8] sm:$0xff]
        %v830 = vld [vmem:[#allocation4 + $0x1e0] sm:$0xff]
        %v831 = vld [vmem:[#allocation4 + $0x1e8] sm:$0xff]
        %v832 = vld [vmem:[#allocation4 + $0x1f0] sm:$0xff]
        %v833 = vld [vmem:[#allocation4 + $0x1f8] sm:$0xff]
        %v834 = vld [vmem:[#allocation4 + $0x200] sm:$0xff]
        %v835 = vld [vmem:[#allocation4 + $0x208] sm:$0xff]
        %v836 = vld [vmem:[#allocation4 + $0x210] sm:$0xff]
        %v837 = vld [vmem:[#allocation4 + $0x218] sm:$0xff]
        %v838 = vld [vmem:[#allocation4 + $0x220] sm:$0xff]
        %v839 = vld [vmem:[#allocation4 + $0x228] sm:$0xff]
        %v840 = vld [vmem:[#allocation4 + $0x230] sm:$0xff]
        %v841 = vld [vmem:[#allocation4 + $0x238] sm:$0xff]
        %v842 = vld [vmem:[#allocation4 + $0x240] sm:$0xff]
        %v843 = vld [vmem:[#allocation4 + $0x248] sm:$0xff]
        %v844 = vld [vmem:[#allocation4 + $0x250] sm:$0xff]
        %v845 = vld [vmem:[#allocation4 + $0x258] sm:$0xff]
        %v846 = vld [vmem:[#allocation4 + $0x260] sm:$0xff]
        %v847 = vld [vmem:[#allocation4 + $0x268] sm:$0xff]
        %v848 = vld [vmem:[#allocation4 + $0x270] sm:$0xff]
        %v849 = vld [vmem:[#allocation4 + $0x278] sm:$0xff]
        %v850 = vld [vmem:[#allocation4 + $0x280] sm:$0xff]
        %v851 = vld [vmem:[#allocation4 + $0x288] sm:$0xff]
        %v852 = vld [vmem:[#allocation4 + $0x290] sm:$0xff]
        %v853 = vld [vmem:[#allocation4 + $0x298] sm:$0xff]
        %v854 = vld [vmem:[#allocation4 + $0x2a0] sm:$0xff]
        %v855 = vld [vmem:[#allocation4 + $0x2a8] sm:$0xff]
        %v856 = vld [vmem:[#allocation4 + $0x2b0] sm:$0xff]
        %v857 = vld [vmem:[#allocation4 + $0x2b8] sm:$0xff]
        %v858 = vld [vmem:[#allocation4 + $0x2c0] sm:$0xff]
        %v859 = vld [vmem:[#allocation4 + $0x2c8] sm:$0xff]
        %v860 = vld [vmem:[#allocation4 + $0x2d0] sm:$0xff]
        %v861 = vld [vmem:[#allocation4 + $0x2d8] sm:$0xff]
        %v862 = vld [vmem:[#allocation4 + $0x2e0] sm:$0xff]
        %v863 = vld [vmem:[#allocation4 + $0x2e8] sm:$0xff]
        %v864 = vld [vmem:[#allocation4 + $0x2f0] sm:$0xff]
        %v865 = vld [vmem:[#allocation4 + $0x2f8] sm:$0xff]
        %v866 = vld [vmem:[#allocation4 + $0x300] sm:$0xff]
        %v867 = vld [vmem:[#allocation4 + $0x308] sm:$0xff]
        %v868 = vld [vmem:[#allocation4 + $0x310] sm:$0xff]
        %v869 = vld [vmem:[#allocation4 + $0x318] sm:$0xff]
        %v870 = vld [vmem:[#allocation4 + $0x320] sm:$0xff]
        %v871 = vld [vmem:[#allocation4 + $0x328] sm:$0xff]
        %v872 = vld [vmem:[#allocation4 + $0x330] sm:$0xff]
        %v873 = vld [vmem:[#allocation4 + $0x338] sm:$0xff]
        %v874 = vld [vmem:[#allocation4 + $0x340] sm:$0xff]
        %v875 = vld [vmem:[#allocation4 + $0x348] sm:$0xff]
        %v876 = vld [vmem:[#allocation4 + $0x350] sm:$0xff]
        %v877 = vld [vmem:[#allocation4 + $0x358] sm:$0xff]
        %v878 = vld [vmem:[#allocation4 + $0x360] sm:$0xff]
        %v879 = vld [vmem:[#allocation4 + $0x368] sm:$0xff]
        %v880 = vld [vmem:[#allocation4 + $0x370] sm:$0xff]
        %v881 = vld [vmem:[#allocation4 + $0x378] sm:$0xff]
        %v882 = vld [vmem:[%s4] sm:$0x1]
        %v884 = vlaneseq
        %v885 = vshrl.u32 %v884, 7
        %v886 = vsub.s32 0, %v885
        %v887 = vrot.slane %v882, %v886
        %889 = vmatprep.subr.mxu0 0.0
        %890 = vmatpush1.msra.mxu0 %v770
        %891 = vmatprep.subr.mxu0 0.0
        %892 = vmatpush1.msra.mxu0 %v771
        %893 = vmatprep.subr.mxu0 0.0
        %894 = vmatpush1.msra.mxu0 %v772
        %895 = vmatprep.subr.mxu0 0.0
        %896 = vmatpush1.msra.mxu0 %v773
        %897 = vmatprep.subr.mxu0 0.0
        %898 = vmatpush1.msra.mxu0 %v774
        %899 = vmatprep.subr.mxu0 0.0
        %900 = vmatpush1.msra.mxu0 %v775
        %901 = vmatprep.subr.mxu0 0.0
        %902 = vmatpush1.msra.mxu0 %v776
        %903 = vmatprep.subr.mxu0 0.0
        %904 = vmatpush1.msra.mxu0 %v777
        %905 = vmatprep.subr.mxu0 0.0
        %906 = vmatpush1.msra.mxu0 %v778
        %907 = vmatprep.subr.mxu0 0.0
        %908 = vmatpush1.msra.mxu0 %v779
        %909 = vmatprep.subr.mxu0 0.0
        %910 = vmatpush1.msra.mxu0 %v780
        %911 = vmatprep.subr.mxu0 0.0
        %912 = vmatpush1.msra.mxu0 %v781
        %913 = vmatprep.subr.mxu0 0.0
        %914 = vmatpush1.msra.mxu0 %v782
        %915 = vmatprep.subr.mxu0 0.0
        %916 = vmatpush1.msra.mxu0 %v783
        %917 = vmatprep.subr.mxu0 0.0
        %918 = vmatpush1.msra.mxu0 %v784
        %919 = vmatprep.subr.mxu0 0.0
        %920 = vmatpush1.msra.mxu0 %v785
        %921 = vmatprep.subr.mxu0 0.0
        %922 = vmatpush1.msra.mxu0 %v786
        %923 = vmatprep.subr.mxu0 0.0
        %924 = vmatpush1.msra.mxu0 %v787
        %925 = vmatprep.subr.mxu0 0.0
        %926 = vmatpush1.msra.mxu0 %v788
        %927 = vmatprep.subr.mxu0 0.0
        %928 = vmatpush1.msra.mxu0 %v789
        %929 = vmatprep.subr.mxu0 0.0
        %930 = vmatpush1.msra.mxu0 %v790
        %931 = vmatprep.subr.mxu0 0.0
        %932 = vmatpush1.msra.mxu0 %v791
        %933 = vmatprep.subr.mxu0 0.0
        %934 = vmatpush1.msra.mxu0 %v792
        %935 = vmatprep.subr.mxu0 0.0
        %936 = vmatpush1.msra.mxu0 %v793
        %937 = vmatprep.subr.mxu0 0.0
        %938 = vmatpush1.msra.mxu0 %v794
        %939 = vmatprep.subr.mxu0 0.0
        %940 = vmatpush1.msra.mxu0 %v795
        %941 = vmatprep.subr.mxu0 0.0
        %942 = vmatpush1.msra.mxu0 %v796
        %943 = vmatprep.subr.mxu0 0.0
        %944 = vmatpush1.msra.mxu0 %v797
        %945 = vmatprep.subr.mxu0 0.0
        %946 = vmatpush1.msra.mxu0 %v798
        %947 = vmatprep.subr.mxu0 0.0
        %948 = vmatpush1.msra.mxu0 %v799
        %949 = vmatprep.subr.mxu0 0.0
        %950 = vmatpush1.msra.mxu0 %v800
        %951 = vmatprep.subr.mxu0 0.0
        %952 = vmatpush1.msra.mxu0 %v801
        %953 = vmatprep.mubr.f32.mxu0 %v725
        %954 = vmatmul.mubr.f32.gmra.mrb[0].mxu0 %v716
        %v955 = vpop.f32.mrb[0].mxu0
        %v956 = vadd.f32 %v887, %v955
        %v957 = vpop.f32.mrb[0].mxu0
        %958 = vmatprep.mubr.f32.mxu0 %v727
        %959 = vmatmul.mubr.f32.gmra.mrb[0].mxu0 %v717
        %v960 = vpop.f32.mrb[0].mxu0
        %v961 = vadd.f32 %v887, %v960
        %v962 = vpop.f32.mrb[0].mxu0
        %963 = vdwg.mxu0
        %964 = vmatprep.subr.mxu0 0.0
        %965 = vmatpush1.msra.mxu0 %v802
        %966 = vmatprep.subr.mxu0 0.0
        %967 = vmatpush1.msra.mxu0 %v803
        %968 = vmatprep.subr.mxu0 0.0
        %969 = vmatpush1.msra.mxu0 %v804
        %970 = vmatprep.subr.mxu0 0.0
        %971 = vmatpush1.msra.mxu0 %v805
        %972 = vmatprep.subr.mxu0 0.0
        %973 = vmatpush1.msra.mxu0 %v806
        %974 = vmatprep.subr.mxu0 0.0
        %975 = vmatpush1.msra.mxu0 %v807
        %976 = vmatprep.subr.mxu0 0.0
        %977 = vmatpush1.msra.mxu0 %v808
        %978 = vmatprep.subr.mxu0 0.0
        %979 = vmatpush1.msra.mxu0 %v809
        %980 = vmatprep.subr.mxu0 0.0
        %981 = vmatpush1.msra.mxu0 %v810
        %982 = vmatprep.subr.mxu0 0.0
        %983 = vmatpush1.msra.mxu0 %v811
        %984 = vmatprep.subr.mxu0 0.0
        %985 = vmatpush1.msra.mxu0 %v812
        %986 = vmatprep.subr.mxu0 0.0
        %987 = vmatpush1.msra.mxu0 %v813
        %988 = vmatprep.subr.mxu0 0.0
        %989 = vmatpush1.msra.mxu0 %v814
        %990 = vmatprep.subr.mxu0 0.0
        %991 = vmatpush1.msra.mxu0 %v815
        %992 = vmatprep.subr.mxu0 0.0
        %993 = vmatpush1.msra.mxu0 %v816
        %994 = vmatprep.subr.mxu0 0.0
        %995 = vmatpush1.msra.mxu0 %v817
        %996 = vmatprep.subr.mxu0 0.0
        %997 = vmatpush1.msra.mxu0 %v818
        %998 = vmatprep.subr.mxu0 0.0
        %999 = vmatpush1.msra.mxu0 %v819
        %1000 = vmatprep.subr.mxu0 0.0
        %1001 = vmatpush1.msra.mxu0 %v820
        %1002 = vmatprep.subr.mxu0 0.0
        %1003 = vmatpush1.msra.mxu0 %v821
        %1004 = vmatprep.subr.mxu0 0.0
        %1005 = vmatpush1.msra.mxu0 %v822
        %1006 = vmatprep.subr.mxu0 0.0
        %1007 = vmatpush1.msra.mxu0 %v823
        %1008 = vmatprep.subr.mxu0 0.0
        %1009 = vmatpush1.msra.mxu0 %v824
        %1010 = vmatprep.subr.mxu0 0.0
        %1011 = vmatpush1.msra.mxu0 %v825
        %1012 = vmatprep.subr.mxu0 0.0
        %1013 = vmatpush1.msra.mxu0 %v826
        %1014 = vmatprep.subr.mxu0 0.0
        %1015 = vmatpush1.msra.mxu0 %v827
        %1016 = vmatprep.subr.mxu0 0.0
        %1017 = vmatpush1.msra.mxu0 %v828
        %1018 = vmatprep.subr.mxu0 0.0
        %1019 = vmatpush1.msra.mxu0 %v829
        %1020 = vmatprep.subr.mxu0 0.0
        %1021 = vmatpush1.msra.mxu0 %v830
        %1022 = vmatprep.subr.mxu0 0.0
        %1023 = vmatpush1.msra.mxu0 %v831
        %1024 = vmatprep.subr.mxu0 0.0
        %1025 = vmatpush1.msra.mxu0 %v832
        %1026 = vmatprep.subr.mxu0 0.0
        %1027 = vmatpush1.msra.mxu0 %v833
        %1028 = vmatprep.mubr.f32.mxu0 %v741
        %1029 = vmatmul.mubr.f32.gmra.mrb[0].mxu0 %v733
        %v1030 = vpop.f32.mrb[0].mxu0
        %v1031 = vadd.f32 %v956, %v1030
        %v1032 = vpop.f32.mrb[0].mxu0
        %1033 = vmatprep.mubr.f32.mxu0 %v743
        %1034 = vmatmul.mubr.f32.gmra.mrb[0].mxu0 %v735
        %v1035 = vpop.f32.mrb[0].mxu0
        %v1036 = vadd.f32 %v961, %v1035
        %v1037 = vpop.f32.mrb[0].mxu0
        %1038 = vdwg.mxu0
        %1039 = vmatprep.subr.mxu0 0.0
        %1040 = vmatpush1.msra.mxu0 %v834
        %1041 = vmatprep.subr.mxu0 0.0
        %1042 = vmatpush1.msra.mxu0 %v835
        %1043 = vmatprep.subr.mxu0 0.0
        %1044 = vmatpush1.msra.mxu0 %v836
        %1045 = vmatprep.subr.mxu0 0.0
        %1046 = vmatpush1.msra.mxu0 %v837
        %1047 = vmatprep.subr.mxu0 0.0
        %1048 = vmatpush1.msra.mxu0 %v838
        %1049 = vmatprep.subr.mxu0 0.0
        %1050 = vmatpush1.msra.mxu0 %v839
        %1051 = vmatprep.subr.mxu0 0.0
        %1052 = vmatpush1.msra.mxu0 %v840
        %1053 = vmatprep.subr.mxu0 0.0
        %1054 = vmatpush1.msra.mxu0 %v841
        %1055 = vmatprep.subr.mxu0 0.0
        %1056 = vmatpush1.msra.mxu0 %v842
        %1057 = vmatprep.subr.mxu0 0.0
        %1058 = vmatpush1.msra.mxu0 %v843
        %1059 = vmatprep.subr.mxu0 0.0
        %1060 = vmatpush1.msra.mxu0 %v844
        %1061 = vmatprep.subr.mxu0 0.0
        %1062 = vmatpush1.msra.mxu0 %v845
        %1063 = vmatprep.subr.mxu0 0.0
        %1064 = vmatpush1.msra.mxu0 %v846
        %1065 = vmatprep.subr.mxu0 0.0
        %1066 = vmatpush1.msra.mxu0 %v847
        %1067 = vmatprep.subr.mxu0 0.0
        %1068 = vmatpush1.msra.mxu0 %v848
        %1069 = vmatprep.subr.mxu0 0.0
        %1070 = vmatpush1.msra.mxu0 %v849
        %1071 = vmatprep.subr.mxu0 0.0
        %1072 = vmatpush1.msra.mxu0 %v850
        %1073 = vmatprep.subr.mxu0 0.0
        %1074 = vmatpush1.msra.mxu0 %v851
        %1075 = vmatprep.subr.mxu0 0.0
        %1076 = vmatpush1.msra.mxu0 %v852
        %1077 = vmatprep.subr.mxu0 0.0
        %1078 = vmatpush1.msra.mxu0 %v853
        %1079 = vmatprep.subr.mxu0 0.0
        %1080 = vmatpush1.msra.mxu0 %v854
        %1081 = vmatprep.subr.mxu0 0.0
        %1082 = vmatpush1.msra.mxu0 %v855
        %1083 = vmatprep.subr.mxu0 0.0
        %1084 = vmatpush1.msra.mxu0 %v856
        %1085 = vmatprep.subr.mxu0 0.0
        %1086 = vmatpush1.msra.mxu0 %v857
        %1087 = vmatprep.subr.mxu0 0.0
        %1088 = vmatpush1.msra.mxu0 %v858
        %1089 = vmatprep.subr.mxu0 0.0
        %1090 = vmatpush1.msra.mxu0 %v859
        %1091 = vmatprep.subr.mxu0 0.0
        %1092 = vmatpush1.msra.mxu0 %v860
        %1093 = vmatprep.subr.mxu0 0.0
        %1094 = vmatpush1.msra.mxu0 %v861
        %1095 = vmatprep.subr.mxu0 0.0
        %1096 = vmatpush1.msra.mxu0 %v862
        %1097 = vmatprep.subr.mxu0 0.0
        %1098 = vmatpush1.msra.mxu0 %v863
        %1099 = vmatprep.subr.mxu0 0.0
        %1100 = vmatpush1.msra.mxu0 %v864
        %1101 = vmatprep.subr.mxu0 0.0
        %1102 = vmatpush1.msra.mxu0 %v865
        %1103 = vmatprep.mubr.f32.mxu0 %v757
        %1104 = vmatmul.mubr.f32.gmra.mrb[0].mxu0 %v749
        %v1105 = vpop.f32.mrb[0].mxu0
        %v1106 = vadd.f32 %v1031, %v1105
        %v1107 = vpop.f32.mrb[0].mxu0
        %1108 = vmatprep.mubr.f32.mxu0 %v759
        %1109 = vmatmul.mubr.f32.gmra.mrb[0].mxu0 %v751
        %v1110 = vpop.f32.mrb[0].mxu0
        %v1111 = vadd.f32 %v1036, %v1110
        %v1112 = vpop.f32.mrb[0].mxu0
        %1113 = vdwg.mxu0
        %1114 = vmatprep.subr.mxu0 0.0
        %1115 = vmatpush1.msra.mxu0 %v866
        %1116 = vmatprep.subr.mxu0 0.0
        %1117 = vmatpush1.msra.mxu0 %v867
        %1118 = vmatprep.subr.mxu0 0.0
        %1119 = vmatpush1.msra.mxu0 %v868
        %1120 = vmatprep.subr.mxu0 0.0
        %1121 = vmatpush1.msra.mxu0 %v869
        %1122 = vmatprep.subr.mxu0 0.0
        %1123 = vmatpush1.msra.mxu0 %v870
        %1124 = vmatprep.subr.mxu0 0.0
        %1125 = vmatpush1.msra.mxu0 %v871
        %1126 = vmatprep.subr.mxu0 0.0
        %1127 = vmatpush1.msra.mxu0 %v872
        %1128 = vmatprep.subr.mxu0 0.0
        %1129 = vmatpush1.msra.mxu0 %v873
        %1130 = vmatprep.subr.mxu0 0.0
        %1131 = vmatpush1.msra.mxu0 %v874
        %1132 = vmatprep.subr.mxu0 0.0
        %1133 = vmatpush1.msra.mxu0 %v875
        %1134 = vmatprep.subr.mxu0 0.0
        %1135 = vmatpush1.msra.mxu0 %v876
        %1136 = vmatprep.subr.mxu0 0.0
        %1137 = vmatpush1.msra.mxu0 %v877
        %1138 = vmatprep.subr.mxu0 0.0
        %1139 = vmatpush1.msra.mxu0 %v878
        %1140 = vmatprep.subr.mxu0 0.0
        %1141 = vmatpush1.msra.mxu0 %v879
        %1142 = vmatprep.subr.mxu0 0.0
        %1143 = vmatpush1.msra.mxu0 %v880
        %1144 = vmatprep.subr.mxu0 0.0
        %1145 = vmatpush1.msra.mxu0 %v881
        %1146 = vmatprep.subr.mxu0 0.0
        %1147 = vmatpush1.msra.mxu0 0.0
        %1148 = vmatprep.subr.mxu0 0.0
        %1149 = vmatpush1.msra.mxu0 0.0
        %1150 = vmatprep.subr.mxu0 0.0
        %1151 = vmatpush1.msra.mxu0 0.0
        %1152 = vmatprep.subr.mxu0 0.0
        %1153 = vmatpush1.msra.mxu0 0.0
        %1154 = vmatprep.subr.mxu0 0.0
        %1155 = vmatpush1.msra.mxu0 0.0
        %1156 = vmatprep.subr.mxu0 0.0
        %1157 = vmatpush1.msra.mxu0 0.0
        %1158 = vmatprep.subr.mxu0 0.0
        %1159 = vmatpush1.msra.mxu0 0.0
        %1160 = vmatprep.subr.mxu0 0.0
        %1161 = vmatpush1.msra.mxu0 0.0
        %1162 = vmatprep.subr.mxu0 0.0
        %1163 = vmatpush1.msra.mxu0 0.0
        %1164 = vmatprep.subr.mxu0 0.0
        %1165 = vmatpush1.msra.mxu0 0.0
        %1166 = vmatprep.subr.mxu0 0.0
        %1167 = vmatpush1.msra.mxu0 0.0
        %1168 = vmatprep.subr.mxu0 0.0
        %1169 = vmatpush1.msra.mxu0 0.0
        %1170 = vmatprep.subr.mxu0 0.0
        %1171 = vmatpush1.msra.mxu0 0.0
        %1172 = vmatprep.subr.mxu0 0.0
        %1173 = vmatpush1.msra.mxu0 0.0
        %1174 = vmatprep.subr.mxu0 0.0
        %1175 = vmatpush1.msra.mxu0 0.0
        %1176 = vmatprep.subr.mxu0 0.0
        %1177 = vmatpush1.msra.mxu0 0.0
        %1178 = vmatprep.mubr.f32.mxu0 0.0
        %1179 = vmatmul.mubr.f32.gmra.mrb[0].mxu0 %v765
        %v1180 = vpop.f32.mrb[0].mxu0
        %v1181 = vadd.f32 %v1106, %v1180
        %v1182 = vpop.f32.mrb[0].mxu0
        %1183 = vmatprep.mubr.f32.mxu0 0.0
        %1184 = vmatmul.mubr.f32.gmra.mrb[0].mxu0 %v767
        %v1185 = vpop.f32.mrb[0].mxu0
        %v1186 = vadd.f32 %v1111, %v1185
        %v1187 = vpop.f32.mrb[0].mxu0
        %1188 = vdwg.mxu0
        %v1189 = vld [vmem:[%s5] sm:$0x1]
        %v1191 = vlaneseq
        %v1192 = vshrl.u32 %v1191, 7
        %v1193 = vsub.s32 0, %v1192
        %v1194 = vrot.slane %v1189, %v1193
        %v1196 = vmul.f32 %v1181, %v1194
        %v1197 = vmul.f32 %v1186, %v1194
        %v1198 = vand.u32 2147483647, %v1196
        %vm1199 = vcmp.le.f32.partialorder %v1198, 0.7853982
        %vm1200 = vcmp.lt.s32.totalorder %v1196, 0
        %v1201 = vand.u32 %v1196, 2139095040
        %v1202 = vshrl.u32 %v1201, 23
        %v1203 = vsub.s32 %v1202, 127
        %v1204 = vand.u32 2147483647, %v1196
        %v1205 = vand.u32 %v1204, 8388607
        %v1206 = vor.u32 %v1205, 8388608
        %v1207 = vsub.s32 0, %v1206
        %v1208 = vadd.s32 %v1203, 1
        %vm1209 = vcmp.gt.s32.totalorder %v1208, 0
        %v1210 = vsel %vm1209, %v1208, 0
        %v1211 = vshrl.u32 %v1210, 5
        %v1212 = vand.u32 %v1210, 31
        %v1213 = vsub.s32 32, %v1212
        %v1214 = vshrl.u32 683565275, %v1213
        %v1215 = vshll.u32 683565275, %v1212
        %v1216 = vshrl.u32 2475754826, %v1213
        %v1217 = vor.u32 %v1215, %v1216
        %v1218 = vshll.u32 2475754826, %v1212
        %v1219 = vshrl.u32 2131351028, %v1213
        %v1220 = vor.u32 %v1218, %v1219
        %v1221 = vshll.u32 2131351028, %v1212
        %v1222 = vshrl.u32 2102212464, %v1213
        %v1223 = vor.u32 %v1221, %v1222
        %v1224 = vshll.u32 2102212464, %v1212
        %v1225 = vshrl.u32 920167782, %v1213
        %v1226 = vor.u32 %v1224, %v1225
        %v1227 = vshll.u32 920167782, %v1212
        %v1228 = vshrl.u32 1326507024, %v1213
        %v1229 = vor.u32 %v1227, %v1228
        %vm1230 = vcmp.lt.s32.totalorder %v1211, 1
        %vm1231 = vcmp.lt.s32.totalorder %v1211, 2
        %vm1232 = vcmp.lt.s32.totalorder %v1211, 3
        %vm1233 = vcmp.lt.s32.totalorder %v1211, 4
        %v1234 = vsel %vm1230, %v1214, %v1217
        %v1235 = vsel %vm1233, %v1223, 2102212464
        %v1236 = vsel %vm1232, %v1220, %v1235
        %v1237 = vsel %vm1231, %v1234, %v1236
        %v1238 = vsel %vm1230, %v1217, %v1220
        %v1239 = vsel %vm1233, %v1226, 920167782
        %v1240 = vsel %vm1232, %v1223, %v1239
        %v1241 = vsel %vm1231, %v1238, %v1240
        %v1242 = vsel %vm1230, %v1220, %v1223
        %v1243 = vsel %vm1233, %v1229, 1326507024
        %v1244 = vsel %vm1232, %v1226, %v1243
        %v1245 = vsel %vm1231, %v1242, %v1244
        %v1246 = vshll.u32 %v1206, 8
        %v1247 = vmul.u32.u64.compose %v1246, %v1245
        %v1248 = vextract.low.u32 %v1247
        %v1249 = vextract.high.u32 %v1247
        %v1250 = vmul.u32.u64.compose %v1246, %v1241
        %v1251 = vextract.low.u32 %v1250
        %v1252 = vextract.high.u32 %v1250
        %v1253 = vmul.u32 %v1246, %v1237
        %v1254 = vadd.s32 %v1249, %v1251
        %vm1255 = vc.u32 %v1249, %v1251
        %v1256 = vadd.s32 %v1252, 1
        %v1257 = vsel %vm1255, %v1256, %v1252
        %v1258 = vadd.s32 %v1253, %v1257
        %v1259 = vadd.s32 %v1258, 536870912
        %v1260 = vshrl.u32 %v1259, 30
        %v1261 = vshll.u32 %v1260, 30
        %v1262 = vsub.s32 %v1258, %v1261
        %vm1263 = vcmp.lt.s32.totalorder %v1262, 0
        %v1264 = vsub.s32 0, %v1262
        %v1265 = vsel %vm1263, %v1264, %v1262
        %v1266 = vclz %v1265
        %v1267 = vsub.s32 %v1266, 2
        %vm1268 = vcmp.gt.s32.totalorder 0, %v1267
        %v1269 = vsel %vm1268, 0, %v1267
        %v1270 = vsub.s32 32, %v1269
        %v1271 = vshll.u32 %v1262, %v1269
        %v1272 = vshrl.u32 %v1254, %v1270
        %v1273 = vor.u32 %v1271, %v1272
        %v1274 = vsub.s32 4294967266, %v1269
        %v1275 = vadd.s32 %v1274, 127
        %v1276 = vshll.u32 %v1275, 23
        %v1277 = vor.u32 4788187, %v1276
        %v1278 = vand.u32 2147483647, %v1277
        %v1280 = vcvt.s32.f32 %v1273
        %v1281 = vmul.f32 %v1280, %v1278
        %v1282 = vxor.u32 %v1281, 2147483648
        %v1283 = vsel %vm1200, %v1282, %v1281
        %v1284 = vsub.s32 4, %v1260
        %v1285 = vsel %vm1200, %v1284, %v1260
        %v1286 = vsel %vm1199, %v1196, %v1283
        %v1287 = vsel %vm1199, 0, %v1285
        %v1288 = vcosq.f32.pop %v1286
        %v1289 = vsinq.f32.pop %v1286
        %vm1290 = vweird.f32 %v1196
        %v1291 = vadd.s32 %v1287, 3
        %v1292 = vand.u32 %v1291, 3
        %vm1293 = vcmp.lt.s32.totalorder %v1292, 2
        %vm1294 = vcmp.eq.s32.totalorder %v1292, 0
        %v1295 = vxor.u32 %v1289, 2147483648
        %v1296 = vsel %vm1294, %v1288, %v1295
        %vm1297 = vcmp.eq.s32.totalorder %v1292, 2
        %v1298 = vxor.u32 %v1288, 2147483648
        %v1299 = vsel %vm1297, %v1298, %v1289
        %v1300 = vsel %vm1293, %v1296, %v1299
        %v1301 = vsel %vm1290, nan, %v1300
        %v1302 = vand.u32 2147483647, %v1197
        %vm1303 = vcmp.le.f32.partialorder %v1302, 0.7853982
        %vm1304 = vcmp.lt.s32.totalorder %v1197, 0
        %v1305 = vand.u32 %v1197, 2139095040
        %v1306 = vshrl.u32 %v1305, 23
        %v1307 = vsub.s32 %v1306, 127
        %v1308 = vand.u32 2147483647, %v1197
        %v1309 = vand.u32 %v1308, 8388607
        %v1310 = vor.u32 %v1309, 8388608
        %v1311 = vsub.s32 0, %v1310
        %v1312 = vadd.s32 %v1307, 1
        %vm1313 = vcmp.gt.s32.totalorder %v1312, 0
        %v1314 = vsel %vm1313, %v1312, 0
        %v1315 = vshrl.u32 %v1314, 5
        %v1316 = vand.u32 %v1314, 31
        %v1317 = vsub.s32 32, %v1316
        %v1318 = vshrl.u32 683565275, %v1317
        %v1319 = vshll.u32 683565275, %v1316
        %v1320 = vshrl.u32 2475754826, %v1317
        %v1321 = vor.u32 %v1319, %v1320
        %v1322 = vshll.u32 2475754826, %v1316
        %v1323 = vshrl.u32 2131351028, %v1317
        %v1324 = vor.u32 %v1322, %v1323
        %v1325 = vshll.u32 2131351028, %v1316
        %v1326 = vshrl.u32 2102212464, %v1317
        %v1327 = vor.u32 %v1325, %v1326
        %v1328 = vshll.u32 2102212464, %v1316
        %v1329 = vshrl.u32 920167782, %v1317
        %v1330 = vor.u32 %v1328, %v1329
        %v1331 = vshll.u32 920167782, %v1316
        %v1332 = vshrl.u32 1326507024, %v1317
        %v1333 = vor.u32 %v1331, %v1332
        %vm1334 = vcmp.lt.s32.totalorder %v1315, 1
        %vm1335 = vcmp.lt.s32.totalorder %v1315, 2
        %vm1336 = vcmp.lt.s32.totalorder %v1315, 3
        %vm1337 = vcmp.lt.s32.totalorder %v1315, 4
        %v1338 = vsel %vm1334, %v1318, %v1321
        %v1339 = vsel %vm1337, %v1327, 2102212464
        %v1340 = vsel %vm1336, %v1324, %v1339
        %v1341 = vsel %vm1335, %v1338, %v1340
        %v1342 = vsel %vm1334, %v1321, %v1324
        %v1343 = vsel %vm1337, %v1330, 920167782
        %v1344 = vsel %vm1336, %v1327, %v1343
        %v1345 = vsel %vm1335, %v1342, %v1344
        %v1346 = vsel %vm1334, %v1324, %v1327
        %v1347 = vsel %vm1337, %v1333, 1326507024
        %v1348 = vsel %vm1336, %v1330, %v1347
        %v1349 = vsel %vm1335, %v1346, %v1348
        %v1350 = vshll.u32 %v1310, 8
        %v1351 = vmul.u32.u64.compose %v1350, %v1349
        %v1352 = vextract.low.u32 %v1351
        %v1353 = vextract.high.u32 %v1351
        %v1354 = vmul.u32.u64.compose %v1350, %v1345
        %v1355 = vextract.low.u32 %v1354
        %v1356 = vextract.high.u32 %v1354
        %v1357 = vmul.u32 %v1350, %v1341
        %v1358 = vadd.s32 %v1353, %v1355
        %vm1359 = vc.u32 %v1353, %v1355
        %v1360 = vadd.s32 %v1356, 1
        %v1361 = vsel %vm1359, %v1360, %v1356
        %v1362 = vadd.s32 %v1357, %v1361
        %v1363 = vadd.s32 %v1362, 536870912
        %v1364 = vshrl.u32 %v1363, 30
        %v1365 = vshll.u32 %v1364, 30
        %v1366 = vsub.s32 %v1362, %v1365
        %vm1367 = vcmp.lt.s32.totalorder %v1366, 0
        %v1368 = vsub.s32 0, %v1366
        %v1369 = vsel %vm1367, %v1368, %v1366
        %v1370 = vclz %v1369
        %v1371 = vsub.s32 %v1370, 2
        %vm1372 = vcmp.gt.s32.totalorder 0, %v1371
        %v1373 = vsel %vm1372, 0, %v1371
        %v1374 = vsub.s32 32, %v1373
        %v1375 = vshll.u32 %v1366, %v1373
        %v1376 = vshrl.u32 %v1358, %v1374
        %v1377 = vor.u32 %v1375, %v1376
        %v1378 = vsub.s32 4294967266, %v1373
        %v1379 = vadd.s32 %v1378, 127
        %v1380 = vshll.u32 %v1379, 23
        %v1381 = vor.u32 4788187, %v1380
        %v1382 = vand.u32 2147483647, %v1381
        %v1384 = vcvt.s32.f32 %v1377
        %v1385 = vmul.f32 %v1384, %v1382
        %v1386 = vxor.u32 %v1385, 2147483648
        %v1387 = vsel %vm1304, %v1386, %v1385
        %v1388 = vsub.s32 4, %v1364
        %v1389 = vsel %vm1304, %v1388, %v1364
        %v1390 = vsel %vm1303, %v1197, %v1387
        %v1391 = vsel %vm1303, 0, %v1389
        %v1392 = vcosq.f32.pop %v1390
        %v1393 = vsinq.f32.pop %v1390
        %vm1394 = vweird.f32 %v1197
        %v1395 = vadd.s32 %v1391, 3
        %v1396 = vand.u32 %v1395, 3
        %vm1397 = vcmp.lt.s32.totalorder %v1396, 2
        %vm1398 = vcmp.eq.s32.totalorder %v1396, 0
        %v1399 = vxor.u32 %v1393, 2147483648
        %v1400 = vsel %vm1398, %v1392, %v1399
        %vm1401 = vcmp.eq.s32.totalorder %v1396, 2
        %v1402 = vxor.u32 %v1392, 2147483648
        %v1403 = vsel %vm1401, %v1402, %v1393
        %v1404 = vsel %vm1397, %v1400, %v1403
        %v1405 = vsel %vm1394, nan, %v1404
        %v1406 = vld [vmem:[%s6] sm:$0x1]
        %v1407 = vmul.f32 %v1301, %v1301
        %v1408 = vmul.f32 %v1405, %v1405
        %v1410 = vlaneseq
        %v1411 = vshrl.u32 %v1410, 7
        %v1412 = vsub.s32 0, %v1411
        %v1413 = vrot.slane %v1406, %v1412
        %v1415 = vmul.f32 %v1413, %v1407
        %v1416 = vmul.f32 %v1413, %v1408
        %v1417 = vadd.f32 %v1181, %v1415
        %v1418 = vadd.f32 %v1186, %v1416
        %v1419 = vld [vmem:[%s7] sm:$0xff]
        %v1420 = vld [vmem:[%s7 + $0x8] sm:$0xff]
        %v1421 = vld [vmem:[%s7 + $0x10] sm:$0xff]
        %v1422 = vld [vmem:[%s7 + $0x18] sm:$0xff]
        %v1423 = vld [vmem:[%s7 + $0x20] sm:$0xff]
        %v1424 = vld [vmem:[%s7 + $0x28] sm:$0xff]
        %v1425 = vld [vmem:[%s7 + $0x30] sm:$0xff]
        %v1426 = vld [vmem:[%s7 + $0x38] sm:$0xff]
        %v1427 = vld [vmem:[%s7 + $0x40] sm:$0xff]
        %v1428 = vld [vmem:[%s7 + $0x48] sm:$0xff]
        %v1429 = vld [vmem:[%s7 + $0x50] sm:$0xff]
        %v1430 = vld [vmem:[%s7 + $0x58] sm:$0xff]
        %v1431 = vld [vmem:[%s7 + $0x60] sm:$0xff]
        %v1432 = vld [vmem:[%s7 + $0x68] sm:$0xff]
        %v1433 = vld [vmem:[%s7 + $0x70] sm:$0xff]
        %v1434 = vld [vmem:[%s7 + $0x78] sm:$0xff]
        %v1435 = vld [vmem:[%s8] sm:$0x1]
        %v1437 = vlaneseq
        %v1438 = vshrl.u32 %v1437, 7
        %v1439 = vsub.s32 0, %v1438
        %v1440 = vrot.slane %v1435, %v1439
        %1442 = vmatprep.subr.mxu0 0.0
        %1443 = vmatpush1.msra.mxu0 %v1419
        %1444 = vmatprep.subr.mxu0 0.0
        %1445 = vmatpush1.msra.mxu0 %v1420
        %1446 = vmatprep.subr.mxu0 0.0
        %1447 = vmatpush1.msra.mxu0 %v1421
        %1448 = vmatprep.subr.mxu0 0.0
        %1449 = vmatpush1.msra.mxu0 %v1422
        %1450 = vmatprep.subr.mxu0 0.0
        %1451 = vmatpush1.msra.mxu0 %v1423
        %1452 = vmatprep.subr.mxu0 0.0
        %1453 = vmatpush1.msra.mxu0 %v1424
        %1454 = vmatprep.subr.mxu0 0.0
        %1455 = vmatpush1.msra.mxu0 %v1425
        %1456 = vmatprep.subr.mxu0 0.0
        %1457 = vmatpush1.msra.mxu0 %v1426
        %1458 = vmatprep.subr.mxu0 0.0
        %1459 = vmatpush1.msra.mxu0 %v1427
        %1460 = vmatprep.subr.mxu0 0.0
        %1461 = vmatpush1.msra.mxu0 %v1428
        %1462 = vmatprep.subr.mxu0 0.0
        %1463 = vmatpush1.msra.mxu0 %v1429
        %1464 = vmatprep.subr.mxu0 0.0
        %1465 = vmatpush1.msra.mxu0 %v1430
        %1466 = vmatprep.subr.mxu0 0.0
        %1467 = vmatpush1.msra.mxu0 %v1431
        %1468 = vmatprep.subr.mxu0 0.0
        %1469 = vmatpush1.msra.mxu0 %v1432
        %1470 = vmatprep.subr.mxu0 0.0
        %1471 = vmatpush1.msra.mxu0 %v1433
        %1472 = vmatprep.subr.mxu0 0.0
        %1473 = vmatpush1.msra.mxu0 %v1434
        %1474 = vmatprep.subr.mxu0 0.0
        %1475 = vmatpush1.msra.mxu0 0.0
        %1476 = vmatprep.subr.mxu0 0.0
        %1477 = vmatpush1.msra.mxu0 0.0
        %1478 = vmatprep.subr.mxu0 0.0
        %1479 = vmatpush1.msra.mxu0 0.0
        %1480 = vmatprep.subr.mxu0 0.0
        %1481 = vmatpush1.msra.mxu0 0.0
        %1482 = vmatprep.subr.mxu0 0.0
        %1483 = vmatpush1.msra.mxu0 0.0
        %1484 = vmatprep.subr.mxu0 0.0
        %1485 = vmatpush1.msra.mxu0 0.0
        %1486 = vmatprep.subr.mxu0 0.0
        %1487 = vmatpush1.msra.mxu0 0.0
        %1488 = vmatprep.subr.mxu0 0.0
        %1489 = vmatpush1.msra.mxu0 0.0
        %1490 = vmatprep.subr.mxu0 0.0
        %1491 = vmatpush1.msra.mxu0 0.0
        %1492 = vmatprep.subr.mxu0 0.0
        %1493 = vmatpush1.msra.mxu0 0.0
        %1494 = vmatprep.subr.mxu0 0.0
        %1495 = vmatpush1.msra.mxu0 0.0
        %1496 = vmatprep.subr.mxu0 0.0
        %1497 = vmatpush1.msra.mxu0 0.0
        %1498 = vmatprep.subr.mxu0 0.0
        %1499 = vmatpush1.msra.mxu0 0.0
        %1500 = vmatprep.subr.mxu0 0.0
        %1501 = vmatpush1.msra.mxu0 0.0
        %1502 = vmatprep.subr.mxu0 0.0
        %1503 = vmatpush1.msra.mxu0 0.0
        %1504 = vmatprep.subr.mxu0 0.0
        %1505 = vmatpush1.msra.mxu0 0.0
        %1506 = vmatprep.mubr.f32.mxu0 0.0
        %1507 = vmatmul.mubr.f32.gmra.mrb[0].mxu0 %v1417
        %v1508 = vpop.f32.mrb[0].mxu0
        %v1509 = vadd.f32 %v1440, %v1508
        %v1510 = vpop.f32.mrb[0].mxu0
        %1511 = vmatprep.mubr.f32.mxu0 0.0
        %1512 = vmatmul.mubr.f32.gmra.mrb[0].mxu0 %v1418
        %v1513 = vpop.f32.mrb[0].mxu0
        %v1514 = vadd.f32 %v1440, %v1513
        %v1515 = vpop.f32.mrb[0].mxu0
        %1516 = vdwg.mxu0
        %v1519 = vrot.slane %v1509, 5
        %v1520 = vrot.slane %v1514, 5
        %v1521 = vsel %vm754, %v1519, %v1520
        %v1525 = vadd.f32 %v378, %v1519
        %v1526 = vadd.f32 %v379, %v1521
        %v1527 = vadd.f32 %v380, %v1520
        %1528 = vst [vmem:[%s313 - $0x3] sm:$0xf8] %v1525
        %1529 = vst [vmem:[%s313 + $0x5] sm:$0xff] %v1526
        %1530 = vst [vmem:[%s313 + $0xd] sm:$0x7] %v1527
        %s1531 = sand.u32 %s214, 1
        %s1532 = scalar_lea.sflag [#allocation6], %s1531
        %s1533 = sand.u32 %s214, 1
        %s1534 = smul.addr %s1533, 16
        %s1535 = scalar_lea.vmem [#allocation7], %s1534
        // Predicated region
        $region94: #{tpu_custom_call.1} parent=51 // pred_check
          %p1536 = pneg %p224
        $region95: #{tpu_custom_call.1} parent=51 // pred_check_branch
          %1538 = sbr.rel (%p1536) target = $region97
        $region96: #{tpu_custom_call.1} parent=51 // pred_region
          %s1539 = smul.u32 2, %s29
          %s1541 = ssub.s32 256, 256
          %1542 = vsyncadd %s1532, %s1541
          %s1543 = smul.addr %s28, 6
          %s1544 = sadd.s32 %s1539, %s1543
          %s1545 = smul.addr %s1544, 128
          %s1546 = scalar_lea.hbm %s9, %s1545
          %s1547 = sshll.u32 %s1535, 4
          %s1548 = int_to_ptr.vmem [resolvable:$true] %s1547
          %1553 = dma.vmem_to_hbm [thread:$0]  %s1548, 256, %s1546, %s1532, 128, 128, 8
        $region97: #{tpu_custom_call.1} parent=51 // pred_fallthru
          _
      $region52: #{tpu_custom_call.1} parent=5 // pred_fallthru
        _
      %p1554 = scmp.le.s32.totalorder 2, %s19
      // Predicated region
      $region98: #{tpu_custom_call.1} parent=5 // pred_check
        %p1555 = pneg %p1554
      $region99: #{tpu_custom_call.1} parent=5 // pred_check_branch
        %1557 = sbr.rel (%p1555) target = $region101
      $region100: #{tpu_custom_call.1} parent=5 // pred_region
        %s1558 = ssub.s32 %s19, 2
        // Predicated region
        $region102: #{tpu_custom_call.1} parent=100 // pred_check
          %p1559 = pneg %p230
        $region103: #{tpu_custom_call.1} parent=100 // pred_check_branch
          %1561 = sbr.rel (%p1559) target = $region105
        $region104: #{tpu_custom_call.1} parent=100 // pred_region
          %s1562 = sand.u32 %s215, 1
          %s1563 = scalar_lea.sflag [#allocation6], %s1562
          %s1564 = sand.u32 %s215, 1
          %s1565 = smul.addr %s1564, 16
          %s1566 = scalar_lea.vmem [#allocation7], %s1565
          %1567 = dma.done %s1563, 256
        $region105: #{tpu_custom_call.1} parent=100 // pred_fallthru
          _
      $region101: #{tpu_custom_call.1} parent=5 // pred_fallthru
        _
    $region6: #{tpu_custom_call.1} parent=1 // loop_footer
      %s23 = sadd.s32 1, %s19
    $region7: #{tpu_custom_call.1} parent=1 // loop_footer_branch
      %18 = sbr.rel target = $region3
    $region8: #{tpu_custom_call.1} parent=1 // loop_exit
      _
    %1568 = vsyncpa [#allocation5], 1
    %s1569 = scalar_lea.sflag [#allocation5], 1
    %1570 = vsyncpa %s1569, 1
    %1571 = vsyncpa [#allocation6], 1
    %s1572 = scalar_lea.sflag [#allocation6], 1
    %1573 = vsyncpa %s1572, 1
  %1574 = vsyncmov [#allocation3]
  %s1575 = vpop.sfrf %1574
  %p1576 = scmp.eq.s32.totalorder %s1575, 0
  %p1577 = pneg %p1576
  %1579 = shalt.err (%p1577)

</llo_original>
